<compile_context>
chip_gen: v7x
topology: tpu7x:2x2x1
jax: 0.10.0
libtpu: 0.0.40
codegen_flags: <defaults>
</compile_context>

<pallas_src>
import functools

import jax
import jax.numpy as jnp
from jax import lax
from jax.experimental import pallas as pl
from jax.experimental.pallas import tpu as pltpu


def _gat_fused_kernel(x_ref, w1_ref, a1srcp_ref, a1dstp_ref, ssum_ref, fexp_ref,
                      b1_ref, w2_ref, a2_ref, b2_ref, mb1_ref, mb2_ref, out_ref,
                      *, heads, hidden, negative_slope):
    """Fused GATConv(Fin->hidden, H heads) + ELU + GATConv(->out_pad) + log_softmax."""
    N = x_ref.shape[0]
    H, F = heads, hidden
    HN, HF = H * N, H * F
    n_bits = (N - 1).bit_length()          # log2(N), N power of two
    f_bits = (F - 1).bit_length()          # log2(F), F power of two
    neg = jnp.float32(negative_slope)

    # ---------------- layer 1: GATConv(Fin -> hidden, heads=H) ----------------
    xw = jnp.dot(x_ref[...], w1_ref[...],
                 preferred_element_type=jnp.float32)                       # [N, HF]
    xw_bf = xw.astype(jnp.bfloat16)

    # Packed attention logits: lane h*N+j of row i carries head h, edge j -> i.
    # dst part comes straight out of one wide matmul (packed RHS built offline):
    #   dstp[i, h*N+j] = alpha_dst[i, h]
    dstp = jnp.dot(xw_bf, a1dstp_ref[...],
                   preferred_element_type=jnp.float32)                     # [N, HN]
    # src part: asp[k, h*N+j] = alpha_src[k, h]; keep only lanes j == k and sum
    # over k with a ones-matmul (MXU) => srcp[i, h*N+j] = alpha_src[j, h].
    asp = jnp.dot(xw_bf, a1srcp_ref[...],
                  preferred_element_type=jnp.float32)                      # [N, HN]
    rows = lax.broadcasted_iota(jnp.int32, (N, HN), 0)
    cols = lax.broadcasted_iota(jnp.int32, (N, HN), 1)
    diag = (cols & (N - 1)) == rows
    scat = jnp.where(diag, asp, jnp.zeros_like(asp))                       # [N, HN]
    srcp = jnp.dot(jnp.ones((N, N), jnp.float32), scat,
                   preferred_element_type=jnp.float32)                     # [N, HN]

    e = dstp + srcp
    e = jnp.where(e > 0, e, neg * e)                       # LeakyReLU
    e = e + mb1_ref[...].astype(jnp.float32)               # additive edge mask (0 / -1e30)

    # Per-row max across ALL packed heads: subtracting a per-row constant cancels
    # exactly in every head's softmax; one lane reduction instead of H.
    m = jnp.max(e, axis=-1, keepdims=True)                                 # [N, 1]
    p = jnp.exp(e - m)                                     # masked entries -> 0
    p_bf = p.astype(jnp.bfloat16)

    # Per-head row sums as ONE MXU matmul (block one-hot S).
    sums = jnp.dot(p_bf, ssum_ref[...],
                   preferred_element_type=jnp.float32)                     # [N, H]

    # Single aggregation matmul with an in-kernel block-diagonal copy of xW.
    xw_rep = jnp.concatenate([xw_bf] * H, axis=0)                          # [HN, HF]
    wrows = lax.broadcasted_iota(jnp.int32, (HN, HF), 0)
    wcols = lax.broadcasted_iota(jnp.int32, (HN, HF), 1)
    blk = (wrows >> n_bits) == (wcols >> f_bits)
    w_blk = jnp.where(blk, xw_rep, jnp.zeros_like(xw_rep))                 # [HN, HF]
    agg = jnp.dot(p_bf, w_blk, preferred_element_type=jnp.float32)         # [N, HF]

    # Normalize AFTER aggregation: expand per-head sums to per-feature lanes via
    # a tiny f32 matmul, then approx-reciprocal on the EUP.
    sums_exp = jnp.dot(sums, fexp_ref[...],
                       preferred_element_type=jnp.float32)                 # [N, HF]
    h1 = agg * pl.reciprocal(sums_exp, approx=True) + b1_ref[...]
    # ELU (alpha=1). exp(x)-1 instead of expm1 for lowering safety; the linear
    # branch is selected for x > 0 so large positives are harmless.
    h1 = jnp.where(h1 > 0, h1, jnp.exp(h1) - 1.0)

    # ---------------- layer 2: GATConv(H*F -> out_pad, heads=1) ---------------
    xw2 = jnp.dot(h1.astype(jnp.bfloat16), w2_ref[...],
                  preferred_element_type=jnp.float32)                      # [N, OUT_PAD]
    xw2_bf = xw2.astype(jnp.bfloat16)
    alpha2 = jnp.dot(xw2_bf, a2_ref[...],
                     preferred_element_type=jnp.float32)                   # [N, 2]
    alpha2_t = jnp.transpose(alpha2)                                       # [2, N]

    e2 = alpha2[:, 1:2] + alpha2_t[0:1, :]                 # dst[i] + src[j]
    e2 = jnp.where(e2 > 0, e2, neg * e2)
    e2 = e2 + mb2_ref[...].astype(jnp.float32)
    m2 = jnp.max(e2, axis=-1, keepdims=True)
    p2 = jnp.exp(e2 - m2)
    inv2 = pl.reciprocal(jnp.sum(p2, axis=-1, keepdims=True), approx=True)
    attn2 = (p2 * inv2).astype(jnp.bfloat16)

    out2 = jnp.dot(attn2, xw2_bf, preferred_element_type=jnp.float32)      # [N, OUT_PAD]
    # b2 holds the real bias in the first out_channels lanes and -1e30 in the
    # padded lanes, so log_softmax automatically ignores padding.
    full = out2 + b2_ref[...]
    mm = jnp.max(full, axis=-1, keepdims=True)
    lse = mm + jnp.log(jnp.sum(jnp.exp(full - mm), axis=-1, keepdims=True))
    out_ref[...] = full - lse                              # one lane-dense store


def build_adj(edge_index, num_nodes):
    """Dense adjacency: adj[dst, src] = 1, plus self loops (PyG GATConv default).

    Note: duplicate/parallel edges collapse to one (differs from PyG on multigraphs).
    """
    src, dst = edge_index[0], edge_index[1]
    adj = jnp.zeros((num_nodes, num_nodes), jnp.float32)
    adj = adj.at[dst, src].set(1.0)
    diag = jnp.arange(num_nodes)
    adj = adj.at[diag, diag].set(1.0)
    return adj


def prepare_gat(params, edge_index, num_nodes, *, heads, hidden, out_channels,
                out_pad=128):
    """One-time packing of graph structure + parameters (hoisted off the hot path)."""
    N, H, F, C = num_nodes, heads, hidden, out_channels
    HN, HF = H * N, H * F

    adj = build_adj(edge_index, N)
    mb = jnp.where(adj > 0, 0.0, -1e30).astype(jnp.float32)        # [N, N]
    mb1 = jnp.tile(mb, (1, H)).astype(jnp.bfloat16)                # [N, H*N] head-packed
    mb2 = mb.astype(jnp.bfloat16)

    # Layer-1 attention projections pre-packed for the lane-packed head layout:
    #   a1dstp[h*F+f, h*N+j] = att_dst1[h, f]   (same for src)
    a1srcp = jnp.zeros((HF, HN), jnp.float32)
    a1dstp = jnp.zeros((HF, HN), jnp.float32)
    ssum = jnp.zeros((HN, H), jnp.float32)       # block one-hot: per-head row sums
    fexp = jnp.zeros((H, HF), jnp.float32)       # block ones: head -> feature lanes
    for h in range(H):
        a1srcp = a1srcp.at[h * F:(h + 1) * F, h * N:(h + 1) * N].set(
            params["att_src1"][h][:, None])
        a1dstp = a1dstp.at[h * F:(h + 1) * F, h * N:(h + 1) * N].set(
            params["att_dst1"][h][:, None])
        ssum = ssum.at[h * N:(h + 1) * N, h].set(1.0)
        fexp = fexp.at[h, h * F:(h + 1) * F].set(1.0)
    b1 = params["bias1"].reshape(1, HF).astype(jnp.float32)

    # Layer 2: pad output features to out_pad lanes; padded lanes masked via bias.
    w2p = jnp.zeros((HF, out_pad), jnp.float32).at[:, :C].set(params["w2"])
    a2 = jnp.zeros((out_pad, 2), jnp.float32)
    a2 = a2.at[:C, 0].set(params["att_src2"][0])
    a2 = a2.at[:C, 1].set(params["att_dst2"][0])
    b2 = jnp.full((1, out_pad), -1e30, jnp.float32)
    b2 = b2.at[0, :C].set(params["bias2"])

    return {
        "w1": params["w1"].astype(jnp.bfloat16),
        "a1srcp": a1srcp.astype(jnp.bfloat16),
        "a1dstp": a1dstp.astype(jnp.bfloat16),
        "ssum": ssum.astype(jnp.bfloat16),
        "fexp": fexp,
        "b1": b1,
        "w2": w2p.astype(jnp.bfloat16),
        "a2": a2.astype(jnp.bfloat16),
        "b2": b2,
        "mb1": mb1,
        "mb2": mb2,
    }


@functools.partial(jax.jit, static_argnames=("out_channels",))
def gat_forward(x, packed, out_channels):
    """dropout(eval=id) -> conv1 -> ELU -> dropout -> conv2 -> log_softmax."""
    N = x.shape[0]
    H = packed["ssum"].shape[1]
    HF = packed["w1"].shape[1]
    F = HF // H
    out_pad = packed["w2"].shape[1]
    assert (N & (N - 1)) == 0 and (F & (F - 1)) == 0, "block masks assume pow2 sizes"

    kernel = functools.partial(_gat_fused_kernel, heads=H, hidden=F,
                               negative_slope=0.2)
    vmem = pl.BlockSpec(memory_space=pltpu.MemorySpace.VMEM)

    out_padded = pl.pallas_call(
        kernel,
        out_shape=jax.ShapeDtypeStruct((N, out_pad), jnp.float32),
        in_specs=[vmem] * 12,
        out_specs=vmem,
    )(
        x.astype(jnp.bfloat16),
        packed["w1"], packed["a1srcp"], packed["a1dstp"],
        packed["ssum"], packed["fexp"], packed["b1"],
        packed["w2"], packed["a2"], packed["b2"],
        packed["mb1"], packed["mb2"],
    )
    return out_padded[:, :out_channels]


def _gat_reference(x, edge_index, params, *, heads, hidden, out_channels,
                   negative_slope=0.2):
    """Pure-JAX f32 reference of the same forward (for a loose parity check)."""
    N = x.shape[0]
    adj = build_adj(edge_index, N)

    def gatconv(h, w, att_src, att_dst, bias, H, F):
        hw = (h @ w).reshape(N, H, F)
        a_src = jnp.einsum("nhf,hf->nh", hw, att_src)
        a_dst = jnp.einsum("nhf,hf->nh", hw, att_dst)
        e = a_dst[:, None, :] + a_src[None, :, :]          # [i, j, h]
        e = jnp.where(e > 0, e, negative_slope * e)
        e = jnp.where(adj[:, :, None] > 0, e, -1e30)
        attn = jax.nn.softmax(e, axis=1)
        out = jnp.einsum("ijh,jhf->ihf", attn, hw)
        return out.reshape(N, H * F) + bias

    h1 = gatconv(x, params["w1"], params["att_src1"], params["att_dst1"],
                 params["bias1"], heads, hidden)
    h1 = jnp.where(h1 > 0, h1, jnp.exp(h1) - 1.0)
    h2 = gatconv(h1, params["w2"], params["att_src2"], params["att_dst2"],
                 params["bias2"], 1, out_channels)
    return jax.nn.log_softmax(h2, axis=1)


if __name__ == "__main__":
    N = 32            # number of graph nodes
    E = 64            # number of edges
    in_channels = 16
    out_channels = 7
    hidden = 8        # GATConv(in, 8, heads=8)
    heads = 8

    key = jax.random.PRNGKey(0)
    keys = jax.random.split(key, 10)

    # Inputs.
    x = jax.random.normal(keys[0], (N, in_channels), jnp.float32)
    src = jax.random.randint(keys[1], (E,), 0, N)
    dst = jax.random.randint(keys[2], (E,), 0, N)
    edge_index = jnp.stack([src, dst])            # [2, E]

    # Deterministic parameter init (glorot-uniform, matching PyG shapes).
    def glorot(k, shape):
        fan_in = shape[0]
        fan_out = shape[1] if len(shape) > 1 else shape[0]
        limit = (6.0 / (fan_in + fan_out)) ** 0.5
        return jax.random.uniform(k, shape, jnp.float32, -limit, limit)

    params = {
        "w1": glorot(keys[3], (in_channels, heads * hidden)),     # lin weight
        "att_src1": glorot(keys[4], (heads, hidden)),
        "att_dst1": glorot(keys[5], (heads, hidden)),
        "bias1": jnp.zeros((heads * hidden,), jnp.float32),
        "w2": glorot(keys[6], (heads * hidden, out_channels)),
        "att_src2": glorot(keys[7], (1, out_channels)),
        "att_dst2": glorot(keys[8], (1, out_channels)),
        "bias2": jnp.zeros((out_channels,), jnp.float32),
    }

    # One-time packing of graph + params; per-call path is just the jitted kernel.
    packed = prepare_gat(params, edge_index, N, heads=heads, hidden=hidden,
                         out_channels=out_channels)

    out = gat_forward(x, packed, out_channels=out_channels)
    out = jax.block_until_ready(out)

    assert out.shape == (N, out_channels), out.shape
    # log_softmax rows should (approximately) sum to 1 in prob space.
    assert bool(jnp.all(jnp.abs(jnp.sum(jnp.exp(out), axis=1) - 1.0) < 1e-3))
    # Loose parity vs the pure-f32 reference (kernel uses bf16 MXU operands and
    # approximate reciprocals, so allow a generous absolute tolerance).
    ref = _gat_reference(x, edge_index, params, heads=heads, hidden=hidden,
                         out_channels=out_channels)
    max_err = float(jnp.max(jnp.abs(out - ref)))
    assert max_err < 0.25, f"max |kernel - reference| = {max_err}"
    print("KERNEL_OK")
</pallas_src>

<mosaic_0001>
module attributes {stable_mosaic.version = 11 : i64} {
  func.func @_gat_fused_kernel(%arg0: memref<32x16xbf16, #tpu.memory_space<vmem>>, %arg1: memref<16x64xbf16, #tpu.memory_space<vmem>>, %arg2: memref<64x256xbf16, #tpu.memory_space<vmem>>, %arg3: memref<64x256xbf16, #tpu.memory_space<vmem>>, %arg4: memref<256x8xbf16, #tpu.memory_space<vmem>>, %arg5: memref<8x64xf32, #tpu.memory_space<vmem>>, %arg6: memref<1x64xf32, #tpu.memory_space<vmem>>, %arg7: memref<64x128xbf16, #tpu.memory_space<vmem>>, %arg8: memref<128x2xbf16, #tpu.memory_space<vmem>>, %arg9: memref<1x128xf32, #tpu.memory_space<vmem>>, %arg10: memref<32x256xbf16, #tpu.memory_space<vmem>>, %arg11: memref<32x32xbf16, #tpu.memory_space<vmem>>, %arg12: memref<32x128xf32, #tpu.memory_space<vmem>>) attributes {dimension_semantics = [], scalar_prefetch = 0 : i64, scratch_operands = 0 : i64, tpu.core_type = #tpu.core_type<tc>} {
    %c0 = arith.constant 0 : index
    %c0_0 = arith.constant 0 : index
    %0 = vector.load %arg0[%c0, %c0_0] : memref<32x16xbf16, #tpu.memory_space<vmem>>, vector<32x16xbf16>
    %c0_1 = arith.constant 0 : index
    %c0_2 = arith.constant 0 : index
    %1 = vector.load %arg1[%c0_1, %c0_2] : memref<16x64xbf16, #tpu.memory_space<vmem>>, vector<16x64xbf16>
    %cst = arith.constant dense<0.000000e+00> : vector<32x64xf32>
    %2 = tpu.matmul %0, %1, %cst {dimension_numbers = #tpu.dot_dimension_numbers<[1], [0], [0], [1], [0, 0, 1, 1], [], []>} : vector<32x16xbf16>, vector<16x64xbf16>, vector<32x64xf32> -> vector<32x64xf32>
    %3 = arith.truncf %2 : vector<32x64xf32> to vector<32x64xbf16>
    %c0_3 = arith.constant 0 : index
    %c0_4 = arith.constant 0 : index
    %4 = vector.load %arg3[%c0_3, %c0_4] : memref<64x256xbf16, #tpu.memory_space<vmem>>, vector<64x256xbf16>
    %cst_5 = arith.constant dense<0.000000e+00> : vector<32x256xf32>
    %5 = tpu.matmul %3, %4, %cst_5 {dimension_numbers = #tpu.dot_dimension_numbers<[1], [0], [0], [1], [0, 0, 1, 1], [], []>} : vector<32x64xbf16>, vector<64x256xbf16>, vector<32x256xf32> -> vector<32x256xf32>
    %c0_6 = arith.constant 0 : index
    %c0_7 = arith.constant 0 : index
    %6 = vector.load %arg2[%c0_6, %c0_7] : memref<64x256xbf16, #tpu.memory_space<vmem>>, vector<64x256xbf16>
    %cst_8 = arith.constant dense<0.000000e+00> : vector<32x256xf32>
    %7 = tpu.matmul %3, %6, %cst_8 {dimension_numbers = #tpu.dot_dimension_numbers<[1], [0], [0], [1], [0, 0, 1, 1], [], []>} : vector<32x64xbf16>, vector<64x256xbf16>, vector<32x256xf32> -> vector<32x256xf32>
    %8 = tpu.iota {dimensions = array<i32: 0>} : vector<32x256xi32>
    %9 = tpu.iota {dimensions = array<i32: 1>} : vector<32x256xi32>
    %c31_i32 = arith.constant 31 : i32
    %10 = vector.broadcast %c31_i32 : i32 to vector<32x256xi32>
    %11 = arith.andi %9, %10 : vector<32x256xi32>
    %12 = arith.cmpi eq, %11, %8 : vector<32x256xi32>
    %cst_9 = arith.constant 0.000000e+00 : f32
    %13 = vector.broadcast %cst_9 : f32 to vector<32x256xf32>
    %14 = arith.select %12, %7, %13 : vector<32x256xi1>, vector<32x256xf32>
    %cst_10 = arith.constant 1.000000e+00 : f32
    %15 = vector.broadcast %cst_10 : f32 to vector<32x32xf32>
    %cst_11 = arith.constant dense<0.000000e+00> : vector<32x256xf32>
    %16 = tpu.matmul %15, %14, %cst_11 {dimension_numbers = #tpu.dot_dimension_numbers<[1], [0], [0], [1], [0, 0, 1, 1], [], []>} : vector<32x32xf32>, vector<32x256xf32>, vector<32x256xf32> -> vector<32x256xf32>
    %17 = arith.addf %5, %16 : vector<32x256xf32>
    %cst_12 = arith.constant 0.000000e+00 : f32
    %18 = vector.broadcast %cst_12 : f32 to vector<32x256xf32>
    %19 = arith.cmpf ogt, %17, %18 : vector<32x256xf32>
    %cst_13 = arith.constant 2.000000e-01 : f32
    %20 = vector.broadcast %cst_13 : f32 to vector<32x256xf32>
    %21 = arith.mulf %20, %17 : vector<32x256xf32>
    %22 = arith.select %19, %17, %21 : vector<32x256xi1>, vector<32x256xf32>
    %c0_14 = arith.constant 0 : index
    %c0_15 = arith.constant 0 : index
    %23 = vector.load %arg10[%c0_14, %c0_15] : memref<32x256xbf16, #tpu.memory_space<vmem>>, vector<32x256xbf16>
    %24 = arith.extf %23 : vector<32x256xbf16> to vector<32x256xf32>
    %25 = arith.addf %22, %24 : vector<32x256xf32>
    %cst_16 = arith.constant dense<0xFF800000> : vector<32xf32>
    %26 = vector.multi_reduction <maximumf>, %25, %cst_16 [1] : vector<32x256xf32> to vector<32xf32>
    %27 = vector.shape_cast %26 : vector<32xf32> to vector<32x1xf32>
    %28 = vector.broadcast %27 : vector<32x1xf32> to vector<32x256xf32>
    %29 = arith.subf %25, %28 : vector<32x256xf32>
    %30 = math.exp %29 : vector<32x256xf32>
    %31 = arith.truncf %30 : vector<32x256xf32> to vector<32x256xbf16>
    %c0_17 = arith.constant 0 : index
    %c0_18 = arith.constant 0 : index
    %32 = vector.load %arg4[%c0_17, %c0_18] : memref<256x8xbf16, #tpu.memory_space<vmem>>, vector<256x8xbf16>
    %cst_19 = arith.constant dense<0.000000e+00> : vector<32x8xf32>
    %33 = tpu.matmul %31, %32, %cst_19 {dimension_numbers = #tpu.dot_dimension_numbers<[1], [0], [0], [1], [0, 0, 1, 1], [], []>} : vector<32x256xbf16>, vector<256x8xbf16>, vector<32x8xf32> -> vector<32x8xf32>
    %34 = tpu.concatenate %3, %3, %3, %3, %3, %3, %3, %3 in 0 : vector<32x64xbf16>, vector<32x64xbf16>, vector<32x64xbf16>, vector<32x64xbf16>, vector<32x64xbf16>, vector<32x64xbf16>, vector<32x64xbf16>, vector<32x64xbf16> -> vector<256x64xbf16>
    %35 = tpu.iota {dimensions = array<i32: 0>} : vector<256x64xi32>
    %36 = tpu.iota {dimensions = array<i32: 1>} : vector<256x64xi32>
    %c5_i32 = arith.constant 5 : i32
    %37 = vector.broadcast %c5_i32 : i32 to vector<256x64xi32>
    %38 = arith.shrsi %35, %37 : vector<256x64xi32>
    %c3_i32 = arith.constant 3 : i32
    %39 = vector.broadcast %c3_i32 : i32 to vector<256x64xi32>
    %40 = arith.shrsi %36, %39 : vector<256x64xi32>
    %41 = arith.cmpi eq, %38, %40 : vector<256x64xi32>
    %cst_20 = arith.constant 0.000000e+00 : bf16
    %42 = vector.broadcast %cst_20 : bf16 to vector<256x64xbf16>
    %43 = arith.select %41, %34, %42 : vector<256x64xi1>, vector<256x64xbf16>
    %cst_21 = arith.constant dense<0.000000e+00> : vector<32x64xf32>
    %44 = tpu.matmul %31, %43, %cst_21 {dimension_numbers = #tpu.dot_dimension_numbers<[1], [0], [0], [1], [0, 0, 1, 1], [], []>} : vector<32x256xbf16>, vector<256x64xbf16>, vector<32x64xf32> -> vector<32x64xf32>
    %c0_22 = arith.constant 0 : index
    %c0_23 = arith.constant 0 : index
    %45 = vector.load %arg5[%c0_22, %c0_23] : memref<8x64xf32, #tpu.memory_space<vmem>>, vector<8x64xf32>
    %cst_24 = arith.constant dense<0.000000e+00> : vector<32x64xf32>
    %46 = tpu.matmul %33, %45, %cst_24 {dimension_numbers = #tpu.dot_dimension_numbers<[1], [0], [0], [1], [0, 0, 1, 1], [], []>} : vector<32x8xf32>, vector<8x64xf32>, vector<32x64xf32> -> vector<32x64xf32>
    %47 = tpu.reciprocal %46 {approx = true} : vector<32x64xf32> -> vector<32x64xf32>
    %48 = arith.mulf %44, %47 : vector<32x64xf32>
    %c0_25 = arith.constant 0 : index
    %c0_26 = arith.constant 0 : index
    %49 = vector.load %arg6[%c0_25, %c0_26] : memref<1x64xf32, #tpu.memory_space<vmem>>, vector<1x64xf32>
    %50 = vector.broadcast %49 : vector<1x64xf32> to vector<32x64xf32>
    %51 = arith.addf %48, %50 : vector<32x64xf32>
    %cst_27 = arith.constant 0.000000e+00 : f32
    %52 = vector.broadcast %cst_27 : f32 to vector<32x64xf32>
    %53 = arith.cmpf ogt, %51, %52 : vector<32x64xf32>
    %54 = math.exp %51 : vector<32x64xf32>
    %cst_28 = arith.constant 1.000000e+00 : f32
    %55 = vector.broadcast %cst_28 : f32 to vector<32x64xf32>
    %56 = arith.subf %54, %55 : vector<32x64xf32>
    %57 = arith.select %53, %51, %56 : vector<32x64xi1>, vector<32x64xf32>
    %58 = arith.truncf %57 : vector<32x64xf32> to vector<32x64xbf16>
    %c0_29 = arith.constant 0 : index
    %c0_30 = arith.constant 0 : index
    %59 = vector.load %arg7[%c0_29, %c0_30] : memref<64x128xbf16, #tpu.memory_space<vmem>>, vector<64x128xbf16>
    %cst_31 = arith.constant dense<0.000000e+00> : vector<32x128xf32>
    %60 = tpu.matmul %58, %59, %cst_31 {dimension_numbers = #tpu.dot_dimension_numbers<[1], [0], [0], [1], [0, 0, 1, 1], [], []>} : vector<32x64xbf16>, vector<64x128xbf16>, vector<32x128xf32> -> vector<32x128xf32>
    %61 = arith.truncf %60 : vector<32x128xf32> to vector<32x128xbf16>
    %c0_32 = arith.constant 0 : index
    %c0_33 = arith.constant 0 : index
    %62 = vector.load %arg8[%c0_32, %c0_33] : memref<128x2xbf16, #tpu.memory_space<vmem>>, vector<128x2xbf16>
    %cst_34 = arith.constant dense<0.000000e+00> : vector<32x2xf32>
    %63 = tpu.matmul %61, %62, %cst_34 {dimension_numbers = #tpu.dot_dimension_numbers<[1], [0], [0], [1], [0, 0, 1, 1], [], []>} : vector<32x128xbf16>, vector<128x2xbf16>, vector<32x2xf32> -> vector<32x2xf32>
    %64 = tpu.transpose %63, [1, 0] : vector<32x2xf32> -> vector<2x32xf32>
    %65 = vector.extract_strided_slice %63 {offsets = [0, 1], sizes = [32, 1], strides = [1, 1]} : vector<32x2xf32> to vector<32x1xf32>
    %66 = vector.extract_strided_slice %64 {offsets = [0, 0], sizes = [1, 32], strides = [1, 1]} : vector<2x32xf32> to vector<1x32xf32>
    %67 = vector.broadcast %65 : vector<32x1xf32> to vector<32x32xf32>
    %68 = vector.broadcast %66 : vector<1x32xf32> to vector<32x32xf32>
    %69 = arith.addf %67, %68 : vector<32x32xf32>
    %cst_35 = arith.constant 0.000000e+00 : f32
    %70 = vector.broadcast %cst_35 : f32 to vector<32x32xf32>
    %71 = arith.cmpf ogt, %69, %70 : vector<32x32xf32>
    %cst_36 = arith.constant 2.000000e-01 : f32
    %72 = vector.broadcast %cst_36 : f32 to vector<32x32xf32>
    %73 = arith.mulf %72, %69 : vector<32x32xf32>
    %74 = arith.select %71, %69, %73 : vector<32x32xi1>, vector<32x32xf32>
    %c0_37 = arith.constant 0 : index
    %c0_38 = arith.constant 0 : index
    %75 = vector.load %arg11[%c0_37, %c0_38] : memref<32x32xbf16, #tpu.memory_space<vmem>>, vector<32x32xbf16>
    %76 = arith.extf %75 : vector<32x32xbf16> to vector<32x32xf32>
    %77 = arith.addf %74, %76 : vector<32x32xf32>
    %cst_39 = arith.constant dense<0xFF800000> : vector<32xf32>
    %78 = vector.multi_reduction <maximumf>, %77, %cst_39 [1] : vector<32x32xf32> to vector<32xf32>
    %79 = vector.shape_cast %78 : vector<32xf32> to vector<32x1xf32>
    %80 = vector.broadcast %79 : vector<32x1xf32> to vector<32x32xf32>
    %81 = arith.subf %77, %80 : vector<32x32xf32>
    %82 = math.exp %81 : vector<32x32xf32>
    %cst_40 = arith.constant dense<0.000000e+00> : vector<32xf32>
    %83 = vector.multi_reduction <add>, %82, %cst_40 [1] : vector<32x32xf32> to vector<32xf32>
    %84 = vector.shape_cast %83 : vector<32xf32> to vector<32x1xf32>
    %85 = tpu.reciprocal %84 {approx = true} : vector<32x1xf32> -> vector<32x1xf32>
    %86 = vector.broadcast %85 : vector<32x1xf32> to vector<32x32xf32>
    %87 = arith.mulf %82, %86 : vector<32x32xf32>
    %88 = arith.truncf %87 : vector<32x32xf32> to vector<32x32xbf16>
    %cst_41 = arith.constant dense<0.000000e+00> : vector<32x128xf32>
    %89 = tpu.matmul %88, %61, %cst_41 {dimension_numbers = #tpu.dot_dimension_numbers<[1], [0], [0], [1], [0, 0, 1, 1], [], []>} : vector<32x32xbf16>, vector<32x128xbf16>, vector<32x128xf32> -> vector<32x128xf32>
    %c0_42 = arith.constant 0 : index
    %c0_43 = arith.constant 0 : index
    %90 = vector.load %arg9[%c0_42, %c0_43] : memref<1x128xf32, #tpu.memory_space<vmem>>, vector<1x128xf32>
    %91 = vector.broadcast %90 : vector<1x128xf32> to vector<32x128xf32>
    %92 = arith.addf %89, %91 : vector<32x128xf32>
    %cst_44 = arith.constant dense<0xFF800000> : vector<32xf32>
    %93 = vector.multi_reduction <maximumf>, %92, %cst_44 [1] : vector<32x128xf32> to vector<32xf32>
    %94 = vector.shape_cast %93 : vector<32xf32> to vector<32x1xf32>
    %95 = vector.broadcast %94 : vector<32x1xf32> to vector<32x128xf32>
    %96 = arith.subf %92, %95 : vector<32x128xf32>
    %97 = math.exp %96 : vector<32x128xf32>
    %cst_45 = arith.constant dense<0.000000e+00> : vector<32xf32>
    %98 = vector.multi_reduction <add>, %97, %cst_45 [1] : vector<32x128xf32> to vector<32xf32>
    %99 = vector.shape_cast %98 : vector<32xf32> to vector<32x1xf32>
    %100 = math.log %99 : vector<32x1xf32>
    %101 = arith.addf %94, %100 : vector<32x1xf32>
    %102 = vector.broadcast %101 : vector<32x1xf32> to vector<32x128xf32>
    %103 = arith.subf %92, %102 : vector<32x128xf32>
    %c0_46 = arith.constant 0 : index
    %c0_47 = arith.constant 0 : index
    %104 = vector.load %arg12[%c0_46, %c0_47] : memref<32x128xf32, #tpu.memory_space<vmem>>, vector<32x128xf32>
    tpu.vector_store %arg12[%c0_46, %c0_47], %103 {strides = array<i32>} : memref<32x128xf32, #tpu.memory_space<vmem>>, vector<32x128xf32>,
    return
  }
}

</mosaic_0001>

<llo_original>
// kernel: gat_forward.1
$region0: #{gat_forward.1}
  #allocation0 [shape = 'u32[]', space=smem, size = 0x4, offset = 0x4, fixed_abs, tag = 'smem constant byte address 0x4 - core index']
  #allocation1 [shape = 'u32[144,128]{1,0:T(1,128)}', space=vmem, size = 0x12000, scoped, tag = 'internal scratch']
  %s0 = inlined_call_operand.vmem [shape: bf16[32,16], index: 0, kind: input, shape index: {}]
  %s1 = inlined_call_operand.vmem [shape: bf16[16,64], index: 1, kind: input, shape index: {}]
  %s2 = inlined_call_operand.vmem [shape: bf16[64,256], index: 2, kind: input, shape index: {}]
  %s3 = inlined_call_operand.vmem [shape: bf16[64,256], index: 3, kind: input, shape index: {}]
  %s4 = inlined_call_operand.vmem [shape: bf16[256,8], index: 4, kind: input, shape index: {}]
  %s5 = inlined_call_operand.vmem [shape: f32[8,64], index: 5, kind: input, shape index: {}]
  %s6 = inlined_call_operand.vmem [shape: f32[1,64], index: 6, kind: input, shape index: {}]
  %s7 = inlined_call_operand.vmem [shape: bf16[64,128], index: 7, kind: input, shape index: {}]
  %s8 = inlined_call_operand.vmem [shape: bf16[128,2], index: 8, kind: input, shape index: {}]
  %s9 = inlined_call_operand.vmem [shape: f32[1,128], index: 9, kind: input, shape index: {}]
  %s10 = inlined_call_operand.vmem [shape: bf16[32,256], index: 10, kind: input, shape index: {}]
  %s11 = inlined_call_operand.vmem [shape: bf16[32,32], index: 11, kind: input, shape index: {}]
  %s12 = inlined_call_operand.vmem [shape: f32[32,128], index: 12, kind: output, shape index: {}]
  %s13 = sld [smem:[#allocation0]]
  $region58: #{gat_forward.1} parent=0
    _
  %s15 = ssub.s32 1, %s13
  %s16 = scalar_select 0, %s15, %s13
  // Predicated region
  $region2: #{gat_forward.1} parent=0 // pred_check
    _
  $region3: #{gat_forward.1} parent=0 // pred_check_branch
    %18 = sbr.rel (0) target = $region5
  $region4: #{gat_forward.1} parent=0 // pred_region
    _
  $region5: #{gat_forward.1} parent=0 // pred_fallthru
    _
  // Predicated region
  $region6: #{gat_forward.1} parent=0 // pred_check
    _
  $region7: #{gat_forward.1} parent=0 // pred_check_branch
    %20 = sbr.rel (0) target = $region9
  $region8: #{gat_forward.1} parent=0 // pred_region
    _
  $region9: #{gat_forward.1} parent=0 // pred_fallthru
    _
  // Predicated region
  $region10: #{gat_forward.1} parent=0 // pred_check
    _
  $region11: #{gat_forward.1} parent=0 // pred_check_branch
    %22 = sbr.rel (0) target = $region13
  $region12: #{gat_forward.1} parent=0 // pred_region
    _
  $region13: #{gat_forward.1} parent=0 // pred_fallthru
    _
  // Predicated region
  $region14: #{gat_forward.1} parent=0 // pred_check
    _
  $region15: #{gat_forward.1} parent=0 // pred_check_branch
    %24 = sbr.rel (0) target = $region17
  $region16: #{gat_forward.1} parent=0 // pred_region
    _
  $region17: #{gat_forward.1} parent=0 // pred_fallthru
    _
  // Predicated region
  $region18: #{gat_forward.1} parent=0 // pred_check
    _
  $region19: #{gat_forward.1} parent=0 // pred_check_branch
    %26 = sbr.rel (0) target = $region21
  $region20: #{gat_forward.1} parent=0 // pred_region
    _
  $region21: #{gat_forward.1} parent=0 // pred_fallthru
    _
  // Predicated region
  $region22: #{gat_forward.1} parent=0 // pred_check
    _
  $region23: #{gat_forward.1} parent=0 // pred_check_branch
    %28 = sbr.rel (0) target = $region25
  $region24: #{gat_forward.1} parent=0 // pred_region
    _
  $region25: #{gat_forward.1} parent=0 // pred_fallthru
    _
  // Predicated region
  $region26: #{gat_forward.1} parent=0 // pred_check
    _
  $region27: #{gat_forward.1} parent=0 // pred_check_branch
    %30 = sbr.rel (0) target = $region29
  $region28: #{gat_forward.1} parent=0 // pred_region
    _
  $region29: #{gat_forward.1} parent=0 // pred_fallthru
    _
  // Predicated region
  $region30: #{gat_forward.1} parent=0 // pred_check
    _
  $region31: #{gat_forward.1} parent=0 // pred_check_branch
    %32 = sbr.rel (0) target = $region33
  $region32: #{gat_forward.1} parent=0 // pred_region
    _
  $region33: #{gat_forward.1} parent=0 // pred_fallthru
    _
  // Predicated region
  $region34: #{gat_forward.1} parent=0 // pred_check
    _
  $region35: #{gat_forward.1} parent=0 // pred_check_branch
    %34 = sbr.rel (0) target = $region37
  $region36: #{gat_forward.1} parent=0 // pred_region
    _
  $region37: #{gat_forward.1} parent=0 // pred_fallthru
    _
  // Predicated region
  $region38: #{gat_forward.1} parent=0 // pred_check
    _
  $region39: #{gat_forward.1} parent=0 // pred_check_branch
    %36 = sbr.rel (0) target = $region41
  $region40: #{gat_forward.1} parent=0 // pred_region
    _
  $region41: #{gat_forward.1} parent=0 // pred_fallthru
    _
  // Predicated region
  $region42: #{gat_forward.1} parent=0 // pred_check
    _
  $region43: #{gat_forward.1} parent=0 // pred_check_branch
    %38 = sbr.rel (0) target = $region45
  $region44: #{gat_forward.1} parent=0 // pred_region
    _
  $region45: #{gat_forward.1} parent=0 // pred_fallthru
    _
  // Predicated region
  $region46: #{gat_forward.1} parent=0 // pred_check
    _
  $region47: #{gat_forward.1} parent=0 // pred_check_branch
    %40 = sbr.rel (0) target = $region49
  $region48: #{gat_forward.1} parent=0 // pred_region
    _
  $region49: #{gat_forward.1} parent=0 // pred_fallthru
    _
  %v42 = vld [vmem:[%s0] sm:$0xf]
  %v43 = vld [vmem:[%s0 + $0x4] sm:$0xf]
  %v44 = vld [vmem:[%s0 + $0x8] sm:$0xf]
  %v45 = vld [vmem:[%s0 + $0xc] sm:$0xf]
  %v46 = vld [vmem:[%s1] sm:$0xf]
  %v47 = vld [vmem:[%s1 + $0x4] sm:$0xf]
  %v52 = vunpack.c.l.b16 %v42
  %v53 = vunpack.c.l.b16 %v43
  %v54 = vunpack.c.l.b16 %v44
  %v55 = vunpack.c.l.b16 %v45
  %v56 = vpack.c.b16 %v53, %v52
  %v57 = vpack.c.b16 %v55, %v54
  %v60 = vunpack.c.l.b16 %v46
  %v61 = vunpack.c.l.b16 %v47
  %v62 = vpack.c.b16 %v61, %v60
  %vm64 = vcmask 130048
  %v66 = vsel %vm64, %v56, 0
  %v69 = vsel %vm64, %v57, 0
  %71 = vmatprep.subr.bf16.mxu0 0
  %72 = vmatpush1.bf16.msra.mxu0 %v62
  %73 = vmatprep.subr.bf16.mxu0 0
  %74 = vmatpush1.bf16.msra.mxu0 0
  %75 = vmatprep.subr.bf16.mxu0 0
  %76 = vmatpush1.bf16.msra.mxu0 0
  %77 = vmatprep.subr.bf16.mxu0 0
  %78 = vmatpush1.bf16.msra.mxu0 0
  %79 = vmatprep.subr.bf16.mxu0 0
  %80 = vmatpush1.bf16.msra.mxu0 0
  %81 = vmatprep.subr.bf16.mxu0 0
  %82 = vmatpush1.bf16.msra.mxu0 0
  %83 = vmatprep.subr.bf16.mxu0 0
  %84 = vmatpush1.bf16.msra.mxu0 0
  %85 = vmatprep.subr.bf16.mxu0 0
  %86 = vmatpush1.bf16.msra.mxu0 0
  %87 = vmatprep.subr.bf16.mxu0 0
  %88 = vmatpush1.bf16.msra.mxu0 0
  %89 = vmatprep.subr.bf16.mxu0 0
  %90 = vmatpush1.bf16.msra.mxu0 0
  %91 = vmatprep.subr.bf16.mxu0 0
  %92 = vmatpush1.bf16.msra.mxu0 0
  %93 = vmatprep.subr.bf16.mxu0 0
  %94 = vmatpush1.bf16.msra.mxu0 0
  %95 = vmatprep.subr.bf16.mxu0 0
  %96 = vmatpush1.bf16.msra.mxu0 0
  %97 = vmatprep.subr.bf16.mxu0 0
  %98 = vmatpush1.bf16.msra.mxu0 0
  %99 = vmatprep.subr.bf16.mxu0 0
  %100 = vmatpush1.bf16.msra.mxu0 0
  %101 = vmatprep.subr.bf16.mxu0 0
  %102 = vmatpush1.bf16.msra.mxu0 0
  %103 = vmatprep.mubr.bf16.mxu0 0
  %104 = vmatmul.mubr.bf16.gmra.mrb[0].mxu0 %v66
  %v105 = vpop.f32.mrb[0].mxu0
  %v106 = vadd.f32 0.0, %v105
  %v107 = vpop.f32.mrb[0].mxu0
  %v108 = vpop.f32.mrb[0].mxu0
  %v109 = vadd.f32 0.0, %v108
  %v110 = vpop.f32.mrb[0].mxu0
  %111 = vmatprep.mubr.bf16.mxu0 0
  %112 = vmatmul.mubr.bf16.gmra.mrb[0].mxu0 %v69
  %v113 = vpop.f32.mrb[0].mxu0
  %v114 = vadd.f32 0.0, %v113
  %v115 = vpop.f32.mrb[0].mxu0
  %v116 = vpop.f32.mrb[0].mxu0
  %v117 = vadd.f32 0.0, %v116
  %v118 = vpop.f32.mrb[0].mxu0
  %119 = vdwg.mxu0
  %v120 = vpack.c.bf16 %v109, %v106
  %v121 = vpack.c.bf16 %v117, %v114
  %v122 = vld [vmem:[%s3] sm:$0xff]
  %v123 = vld [vmem:[%s3 + $0x8] sm:$0xff]
  %v124 = vld [vmem:[%s3 + $0x10] sm:$0xff]
  %v125 = vld [vmem:[%s3 + $0x18] sm:$0xff]
  %v126 = vld [vmem:[%s3 + $0x20] sm:$0xff]
  %v127 = vld [vmem:[%s3 + $0x28] sm:$0xff]
  %v128 = vld [vmem:[%s3 + $0x30] sm:$0xff]
  %v129 = vld [vmem:[%s3 + $0x38] sm:$0xff]
  %v130 = vld [vmem:[%s2] sm:$0xff]
  %v131 = vld [vmem:[%s2 + $0x8] sm:$0xff]
  %v132 = vld [vmem:[%s2 + $0x10] sm:$0xff]
  %v133 = vld [vmem:[%s2 + $0x18] sm:$0xff]
  %v134 = vld [vmem:[%s2 + $0x20] sm:$0xff]
  %v135 = vld [vmem:[%s2 + $0x28] sm:$0xff]
  %v136 = vld [vmem:[%s2 + $0x30] sm:$0xff]
  %v137 = vld [vmem:[%s2 + $0x38] sm:$0xff]
  %v146 = vunpack.c.l.b16 %v130
  %v147 = vunpack.c.h.b16 %v130
  %v148 = vunpack.c.l.b16 %v131
  %v149 = vunpack.c.h.b16 %v131
  %v150 = vunpack.c.l.b16 %v132
  %v151 = vunpack.c.h.b16 %v132
  %v152 = vunpack.c.l.b16 %v133
  %v153 = vunpack.c.h.b16 %v133
  %v154 = vunpack.c.l.b16 %v134
  %v155 = vunpack.c.h.b16 %v134
  %v156 = vunpack.c.l.b16 %v135
  %v157 = vunpack.c.h.b16 %v135
  %v158 = vunpack.c.l.b16 %v136
  %v159 = vunpack.c.h.b16 %v136
  %v160 = vunpack.c.l.b16 %v137
  %v161 = vunpack.c.h.b16 %v137
  %v162 = vpack.c.b16 %v148, %v146
  %v163 = vpack.c.b16 %v149, %v147
  %v164 = vpack.c.b16 %v152, %v150
  %v165 = vpack.c.b16 %v153, %v151
  %v166 = vpack.c.b16 %v156, %v154
  %v167 = vpack.c.b16 %v157, %v155
  %v168 = vpack.c.b16 %v160, %v158
  %v169 = vpack.c.b16 %v161, %v159
  %vm178 = vcmask 523264
  %v180 = vsel %vm178, %v120, 0
  %v183 = vsel %vm178, %v121, 0
  %185 = vmatprep.subr.bf16.mxu0 %v163
  %186 = vmatpush1.bf16.msra.mxu0 %v162
  %187 = vmatprep.subr.bf16.mxu0 %v165
  %188 = vmatpush1.bf16.msra.mxu0 %v164
  %189 = vmatprep.subr.bf16.mxu0 %v167
  %190 = vmatpush1.bf16.msra.mxu0 %v166
  %191 = vmatprep.subr.bf16.mxu0 %v169
  %192 = vmatpush1.bf16.msra.mxu0 %v168
  %193 = vmatprep.subr.bf16.mxu0 0
  %194 = vmatpush1.bf16.msra.mxu0 0
  %195 = vmatprep.subr.bf16.mxu0 0
  %196 = vmatpush1.bf16.msra.mxu0 0
  %197 = vmatprep.subr.bf16.mxu0 0
  %198 = vmatpush1.bf16.msra.mxu0 0
  %199 = vmatprep.subr.bf16.mxu0 0
  %200 = vmatpush1.bf16.msra.mxu0 0
  %201 = vmatprep.subr.bf16.mxu0 0
  %202 = vmatpush1.bf16.msra.mxu0 0
  %203 = vmatprep.subr.bf16.mxu0 0
  %204 = vmatpush1.bf16.msra.mxu0 0
  %205 = vmatprep.subr.bf16.mxu0 0
  %206 = vmatpush1.bf16.msra.mxu0 0
  %207 = vmatprep.subr.bf16.mxu0 0
  %208 = vmatpush1.bf16.msra.mxu0 0
  %209 = vmatprep.subr.bf16.mxu0 0
  %210 = vmatpush1.bf16.msra.mxu0 0
  %211 = vmatprep.subr.bf16.mxu0 0
  %212 = vmatpush1.bf16.msra.mxu0 0
  %213 = vmatprep.subr.bf16.mxu0 0
  %214 = vmatpush1.bf16.msra.mxu0 0
  %215 = vmatprep.subr.bf16.mxu0 0
  %216 = vmatpush1.bf16.msra.mxu0 0
  %217 = vmatprep.mubr.bf16.mxu0 0
  %218 = vmatmul.mubr.bf16.gmra.mrb[0].mxu0 %v180
  %v219 = vpop.f32.mrb[0].mxu0
  %v220 = vadd.f32 0.0, %v219
  %v221 = vpop.f32.mrb[0].mxu0
  %v222 = vadd.f32 0.0, %v221
  %v223 = vpop.f32.mrb[0].mxu0
  %v224 = vadd.f32 0.0, %v223
  %v225 = vpop.f32.mrb[0].mxu0
  %v226 = vadd.f32 0.0, %v225
  %227 = vmatprep.mubr.bf16.mxu0 0
  %228 = vmatmul.mubr.bf16.gmra.mrb[0].mxu0 %v183
  %v229 = vpop.f32.mrb[0].mxu0
  %v230 = vadd.f32 0.0, %v229
  %v231 = vpop.f32.mrb[0].mxu0
  %v232 = vadd.f32 0.0, %v231
  %v233 = vpop.f32.mrb[0].mxu0
  %v234 = vadd.f32 0.0, %v233
  %v235 = vpop.f32.mrb[0].mxu0
  %v236 = vadd.f32 0.0, %v235
  %237 = vdwg.mxu0
  %v238 = vlaneseq
  %v239 = vshrl.u32 %v238, 7
  %v240 = vadd.s32 %v239, 8
  %v241 = vadd.s32 %v239, 16
  %v242 = vadd.s32 %v239, 24
  %v243 = vlaneseq
  %v244 = vand.u32 %v243, 127
  %v245 = vadd.s32 %v244, 128
  %v246 = vand.u32 %v244, 31
  %v247 = vand.u32 %v245, 31
  %vm248 = vcmp.eq.s32.totalorder %v246, %v239
  %vm249 = vcmp.eq.s32.totalorder %v247, %v239
  %vm250 = vcmp.eq.s32.totalorder %v246, %v240
  %vm251 = vcmp.eq.s32.totalorder %v247, %v240
  %vm252 = vcmp.eq.s32.totalorder %v246, %v241
  %vm253 = vcmp.eq.s32.totalorder %v247, %v241
  %vm254 = vcmp.eq.s32.totalorder %v246, %v242
  %vm255 = vcmp.eq.s32.totalorder %v247, %v242
  %v256 = vsel %vm248, %v220, 0.0
  %v257 = vsel %vm249, %v222, 0.0
  %v258 = vsel %vm250, %v224, 0.0
  %v259 = vsel %vm251, %v226, 0.0
  %v260 = vsel %vm252, %v230, 0.0
  %v261 = vsel %vm253, %v232, 0.0
  %v262 = vsel %vm254, %v234, 0.0
  %v263 = vsel %vm255, %v236, 0.0
  %vm264 = vcmask 261120
  %v266 = vsel %vm264, 1.0, 0
  %268 = vmatprep.subr.mxu0 %v257
  %269 = vmatpush1.msra.mxu0 %v256
  %270 = vmatprep.subr.mxu0 %v259
  %271 = vmatpush1.msra.mxu0 %v258
  %272 = vmatprep.subr.mxu0 %v261
  %273 = vmatpush1.msra.mxu0 %v260
  %274 = vmatprep.subr.mxu0 %v263
  %275 = vmatpush1.msra.mxu0 %v262
  %276 = vmatprep.subr.mxu0 0.0
  %277 = vmatpush1.msra.mxu0 0.0
  %278 = vmatprep.subr.mxu0 0.0
  %279 = vmatpush1.msra.mxu0 0.0
  %280 = vmatprep.subr.mxu0 0.0
  %281 = vmatpush1.msra.mxu0 0.0
  %282 = vmatprep.subr.mxu0 0.0
  %283 = vmatpush1.msra.mxu0 0.0
  %284 = vmatprep.subr.mxu0 0.0
  %285 = vmatpush1.msra.mxu0 0.0
  %286 = vmatprep.subr.mxu0 0.0
  %287 = vmatpush1.msra.mxu0 0.0
  %288 = vmatprep.subr.mxu0 0.0
  %289 = vmatpush1.msra.mxu0 0.0
  %290 = vmatprep.subr.mxu0 0.0
  %291 = vmatpush1.msra.mxu0 0.0
  %292 = vmatprep.subr.mxu0 0.0
  %293 = vmatpush1.msra.mxu0 0.0
  %294 = vmatprep.subr.mxu0 0.0
  %295 = vmatpush1.msra.mxu0 0.0
  %296 = vmatprep.subr.mxu0 0.0
  %297 = vmatpush1.msra.mxu0 0.0
  %298 = vmatprep.subr.mxu0 0.0
  %299 = vmatpush1.msra.mxu0 0.0
  %300 = vmatprep.subr.mxu0 0.0
  %301 = vmatpush1.msra.mxu0 0.0
  %302 = vmatprep.subr.mxu0 0.0
  %303 = vmatpush1.msra.mxu0 0.0
  %304 = vmatprep.subr.mxu0 0.0
  %305 = vmatpush1.msra.mxu0 0.0
  %306 = vmatprep.subr.mxu0 0.0
  %307 = vmatpush1.msra.mxu0 0.0
  %308 = vmatprep.subr.mxu0 0.0
  %309 = vmatpush1.msra.mxu0 0.0
  %310 = vmatprep.subr.mxu0 0.0
  %311 = vmatpush1.msra.mxu0 0.0
  %312 = vmatprep.subr.mxu0 0.0
  %313 = vmatpush1.msra.mxu0 0.0
  %314 = vmatprep.subr.mxu0 0.0
  %315 = vmatpush1.msra.mxu0 0.0
  %316 = vmatprep.subr.mxu0 0.0
  %317 = vmatpush1.msra.mxu0 0.0
  %318 = vmatprep.subr.mxu0 0.0
  %319 = vmatpush1.msra.mxu0 0.0
  %320 = vmatprep.subr.mxu0 0.0
  %321 = vmatpush1.msra.mxu0 0.0
  %322 = vmatprep.subr.mxu0 0.0
  %323 = vmatpush1.msra.mxu0 0.0
  %324 = vmatprep.subr.mxu0 0.0
  %325 = vmatpush1.msra.mxu0 0.0
  %326 = vmatprep.subr.mxu0 0.0
  %327 = vmatpush1.msra.mxu0 0.0
  %328 = vmatprep.subr.mxu0 0.0
  %329 = vmatpush1.msra.mxu0 0.0
  %330 = vmatprep.subr.mxu0 0.0
  %331 = vmatpush1.msra.mxu0 0.0
  %332 = vmatprep.mubr.f32.mxu0 0.0
  %333 = vmatmul.mubr.f32.gmra.mrb[0].mxu0 %v266
  %v334 = vpop.f32.mrb[0].mxu0
  %v335 = vadd.f32 0.0, %v334
  %v336 = vpop.f32.mrb[0].mxu0
  %v337 = vadd.f32 0.0, %v336
  %338 = vmatprep.mubr.f32.mxu0 0.0
  %339 = vmatmul.mubr.f32.gmra.mrb[0].mxu0 %v266
  %v340 = vpop.f32.mrb[0].mxu0
  %v341 = vadd.f32 0.0, %v340
  %v342 = vpop.f32.mrb[0].mxu0
  %v343 = vadd.f32 0.0, %v342
  %344 = vmatprep.mubr.f32.mxu0 0.0
  %345 = vmatmul.mubr.f32.gmra.mrb[0].mxu0 %v266
  %v346 = vpop.f32.mrb[0].mxu0
  %v347 = vadd.f32 0.0, %v346
  %v348 = vpop.f32.mrb[0].mxu0
  %v349 = vadd.f32 0.0, %v348
  %350 = vmatprep.mubr.f32.mxu0 0.0
  %351 = vmatmul.mubr.f32.gmra.mrb[0].mxu0 %v266
  %v352 = vpop.f32.mrb[0].mxu0
  %v353 = vadd.f32 0.0, %v352
  %v354 = vpop.f32.mrb[0].mxu0
  %v355 = vadd.f32 0.0, %v354
  %356 = vdwg.mxu0
  %v365 = vunpack.c.l.b16 %v122
  %v366 = vunpack.c.h.b16 %v122
  %v367 = vunpack.c.l.b16 %v123
  %v368 = vunpack.c.h.b16 %v123
  %v369 = vunpack.c.l.b16 %v124
  %v370 = vunpack.c.h.b16 %v124
  %v371 = vunpack.c.l.b16 %v125
  %v372 = vunpack.c.h.b16 %v125
  %v373 = vunpack.c.l.b16 %v126
  %v374 = vunpack.c.h.b16 %v126
  %v375 = vunpack.c.l.b16 %v127
  %v376 = vunpack.c.h.b16 %v127
  %v377 = vunpack.c.l.b16 %v128
  %v378 = vunpack.c.h.b16 %v128
  %v379 = vunpack.c.l.b16 %v129
  %v380 = vunpack.c.h.b16 %v129
  %v381 = vpack.c.b16 %v367, %v365
  %v382 = vpack.c.b16 %v368, %v366
  %v383 = vpack.c.b16 %v371, %v369
  %v384 = vpack.c.b16 %v372, %v370
  %v385 = vpack.c.b16 %v375, %v373
  %v386 = vpack.c.b16 %v376, %v374
  %v387 = vpack.c.b16 %v379, %v377
  %v388 = vpack.c.b16 %v380, %v378
  %397 = vmatprep.subr.bf16.mxu0 %v382
  %398 = vmatpush1.bf16.msra.mxu0 %v381
  %399 = vmatprep.subr.bf16.mxu0 %v384
  %400 = vmatpush1.bf16.msra.mxu0 %v383
  %401 = vmatprep.subr.bf16.mxu0 %v386
  %402 = vmatpush1.bf16.msra.mxu0 %v385
  %403 = vmatprep.subr.bf16.mxu0 %v388
  %404 = vmatpush1.bf16.msra.mxu0 %v387
  %405 = vmatprep.subr.bf16.mxu0 0
  %406 = vmatpush1.bf16.msra.mxu0 0
  %407 = vmatprep.subr.bf16.mxu0 0
  %408 = vmatpush1.bf16.msra.mxu0 0
  %409 = vmatprep.subr.bf16.mxu0 0
  %410 = vmatpush1.bf16.msra.mxu0 0
  %411 = vmatprep.subr.bf16.mxu0 0
  %412 = vmatpush1.bf16.msra.mxu0 0
  %413 = vmatprep.subr.bf16.mxu0 0
  %414 = vmatpush1.bf16.msra.mxu0 0
  %415 = vmatprep.subr.bf16.mxu0 0
  %416 = vmatpush1.bf16.msra.mxu0 0
  %417 = vmatprep.subr.bf16.mxu0 0
  %418 = vmatpush1.bf16.msra.mxu0 0
  %419 = vmatprep.subr.bf16.mxu0 0
  %420 = vmatpush1.bf16.msra.mxu0 0
  %421 = vmatprep.subr.bf16.mxu0 0
  %422 = vmatpush1.bf16.msra.mxu0 0
  %423 = vmatprep.subr.bf16.mxu0 0
  %424 = vmatpush1.bf16.msra.mxu0 0
  %425 = vmatprep.subr.bf16.mxu0 0
  %426 = vmatpush1.bf16.msra.mxu0 0
  %427 = vmatprep.subr.bf16.mxu0 0
  %428 = vmatpush1.bf16.msra.mxu0 0
  %429 = vmatprep.mubr.bf16.mxu0 0
  %430 = vmatmul.mubr.bf16.gmra.mrb[0].mxu0 %v180
  %v431 = vpop.f32.mrb[0].mxu0
  %v432 = vadd.f32 %v335, %v431
  %v433 = vpop.f32.mrb[0].mxu0
  %v434 = vadd.f32 %v337, %v433
  %v435 = vpop.f32.mrb[0].mxu0
  %v436 = vadd.f32 %v341, %v435
  %v437 = vpop.f32.mrb[0].mxu0
  %v438 = vadd.f32 %v343, %v437
  %439 = vmatprep.mubr.bf16.mxu0 0
  %440 = vmatmul.mubr.bf16.gmra.mrb[0].mxu0 %v183
  %v441 = vpop.f32.mrb[0].mxu0
  %v442 = vadd.f32 %v347, %v441
  %v443 = vpop.f32.mrb[0].mxu0
  %v444 = vadd.f32 %v349, %v443
  %v445 = vpop.f32.mrb[0].mxu0
  %v446 = vadd.f32 %v353, %v445
  %v447 = vpop.f32.mrb[0].mxu0
  %v448 = vadd.f32 %v355, %v447
  %449 = vdwg.mxu0
  %vm450 = vcmp.gt.f32.partialorder %v432, 0.0
  %vm451 = vcmp.gt.f32.partialorder %v434, 0.0
  %vm452 = vcmp.gt.f32.partialorder %v436, 0.0
  %vm453 = vcmp.gt.f32.partialorder %v438, 0.0
  %vm454 = vcmp.gt.f32.partialorder %v442, 0.0
  %vm455 = vcmp.gt.f32.partialorder %v444, 0.0
  %vm456 = vcmp.gt.f32.partialorder %v446, 0.0
  %vm457 = vcmp.gt.f32.partialorder %v448, 0.0
  %v458 = vmul.f32 %v432, 0.2
  %v459 = vmul.f32 %v434, 0.2
  %v460 = vmul.f32 %v436, 0.2
  %v461 = vmul.f32 %v438, 0.2
  %v462 = vmul.f32 %v442, 0.2
  %v463 = vmul.f32 %v444, 0.2
  %v464 = vmul.f32 %v446, 0.2
  %v465 = vmul.f32 %v448, 0.2
  %v466 = vsel %vm450, %v432, %v458
  %v467 = vsel %vm451, %v434, %v459
  %v468 = vsel %vm452, %v436, %v460
  %v469 = vsel %vm453, %v438, %v461
  %v470 = vsel %vm454, %v442, %v462
  %v471 = vsel %vm455, %v444, %v463
  %v472 = vsel %vm456, %v446, %v464
  %v473 = vsel %vm457, %v448, %v465
  %v474 = vld [vmem:[%s10] sm:$0xff]
  %v475 = vld [vmem:[%s10 + $0x8] sm:$0xff]
  %v476 = vld [vmem:[%s10 + $0x10] sm:$0xff]
  %v477 = vld [vmem:[%s10 + $0x18] sm:$0xff]
  %v478 = vunpack.c.l.bf16 %v474
  %v479 = vunpack.c.h.bf16 %v474
  %v480 = vunpack.c.l.bf16 %v475
  %v481 = vunpack.c.h.bf16 %v475
  %v482 = vunpack.c.l.bf16 %v476
  %v483 = vunpack.c.h.bf16 %v476
  %v484 = vunpack.c.l.bf16 %v477
  %v485 = vunpack.c.h.bf16 %v477
  %v486 = vadd.f32 %v466, %v478
  %v487 = vadd.f32 %v467, %v479
  %v488 = vadd.f32 %v468, %v480
  %v489 = vadd.f32 %v469, %v481
  %v490 = vadd.f32 %v470, %v482
  %v491 = vadd.f32 %v471, %v483
  %v492 = vadd.f32 %v472, %v484
  %v493 = vadd.f32 %v473, %v485
  %v494 = vmax.f32 %v486, %v487
  %495 = vmax.xlane.f32.xlu0 %v494
  %v496 = vpop.xlane.xlu0 %495
  %v497 = vmax.f32 %v488, %v489
  %498 = vmax.xlane.f32.xlu0 %v497
  %v499 = vpop.xlane.xlu0 %498
  %v500 = vmax.f32 %v490, %v491
  %501 = vmax.xlane.f32.xlu0 %v500
  %v502 = vpop.xlane.xlu0 %501
  %v503 = vmax.f32 %v492, %v493
  %504 = vmax.xlane.f32.xlu0 %v503
  %v505 = vpop.xlane.xlu0 %504
  %v506 = vsub.f32 %v486, %v496
  %v507 = vsub.f32 %v487, %v496
  %v508 = vsub.f32 %v488, %v499
  %v509 = vsub.f32 %v489, %v499
  %v510 = vsub.f32 %v490, %v502
  %v511 = vsub.f32 %v491, %v502
  %v512 = vsub.f32 %v492, %v505
  %v513 = vsub.f32 %v493, %v505
  %v514 = vmul.f32 %v506, 1.442695
  %v515 = vpow.pop %v514
  %v516 = vmul.f32 %v507, 1.442695
  %v517 = vpow.pop %v516
  %v518 = vmul.f32 %v508, 1.442695
  %v519 = vpow.pop %v518
  %v520 = vmul.f32 %v509, 1.442695
  %v521 = vpow.pop %v520
  %v522 = vmul.f32 %v510, 1.442695
  %v523 = vpow.pop %v522
  %v524 = vmul.f32 %v511, 1.442695
  %v525 = vpow.pop %v524
  %v526 = vmul.f32 %v512, 1.442695
  %v527 = vpow.pop %v526
  %v528 = vmul.f32 %v513, 1.442695
  %v529 = vpow.pop %v528
  %v530 = vpack.c.bf16 %v519, %v515
  %v531 = vpack.c.bf16 %v521, %v517
  %v532 = vpack.c.bf16 %v527, %v523
  %v533 = vpack.c.bf16 %v529, %v525
  %v534 = vld [vmem:[%s4] sm:$0xf]
  %v535 = vld [vmem:[%s4 + $0x4] sm:$0xf]
  %v536 = vld [vmem:[%s4 + $0x8] sm:$0xf]
  %v537 = vld [vmem:[%s4 + $0xc] sm:$0xf]
  %v538 = vld [vmem:[%s4 + $0x10] sm:$0xf]
  %v539 = vld [vmem:[%s4 + $0x14] sm:$0xf]
  %v540 = vld [vmem:[%s4 + $0x18] sm:$0xf]
  %v541 = vld [vmem:[%s4 + $0x1c] sm:$0xf]
  %v542 = vld [vmem:[%s4 + $0x20] sm:$0xf]
  %v543 = vld [vmem:[%s4 + $0x24] sm:$0xf]
  %v544 = vld [vmem:[%s4 + $0x28] sm:$0xf]
  %v545 = vld [vmem:[%s4 + $0x2c] sm:$0xf]
  %v546 = vld [vmem:[%s4 + $0x30] sm:$0xf]
  %v547 = vld [vmem:[%s4 + $0x34] sm:$0xf]
  %v548 = vld [vmem:[%s4 + $0x38] sm:$0xf]
  %v549 = vld [vmem:[%s4 + $0x3c] sm:$0xf]
  %v550 = vld [vmem:[%s4 + $0x40] sm:$0xf]
  %v551 = vld [vmem:[%s4 + $0x44] sm:$0xf]
  %v552 = vld [vmem:[%s4 + $0x48] sm:$0xf]
  %v553 = vld [vmem:[%s4 + $0x4c] sm:$0xf]
  %v554 = vld [vmem:[%s4 + $0x50] sm:$0xf]
  %v555 = vld [vmem:[%s4 + $0x54] sm:$0xf]
  %v556 = vld [vmem:[%s4 + $0x58] sm:$0xf]
  %v557 = vld [vmem:[%s4 + $0x5c] sm:$0xf]
  %v558 = vld [vmem:[%s4 + $0x60] sm:$0xf]
  %v559 = vld [vmem:[%s4 + $0x64] sm:$0xf]
  %v560 = vld [vmem:[%s4 + $0x68] sm:$0xf]
  %v561 = vld [vmem:[%s4 + $0x6c] sm:$0xf]
  %v562 = vld [vmem:[%s4 + $0x70] sm:$0xf]
  %v563 = vld [vmem:[%s4 + $0x74] sm:$0xf]
  %v564 = vld [vmem:[%s4 + $0x78] sm:$0xf]
  %v565 = vld [vmem:[%s4 + $0x7c] sm:$0xf]
  %v598 = vunpack.c.l.b16 %v534
  %v599 = vunpack.c.l.b16 %v535
  %v600 = vunpack.c.l.b16 %v536
  %v601 = vunpack.c.l.b16 %v537
  %v602 = vunpack.c.l.b16 %v538
  %v603 = vunpack.c.l.b16 %v539
  %v604 = vunpack.c.l.b16 %v540
  %v605 = vunpack.c.l.b16 %v541
  %v606 = vunpack.c.l.b16 %v542
  %v607 = vunpack.c.l.b16 %v543
  %v608 = vunpack.c.l.b16 %v544
  %v609 = vunpack.c.l.b16 %v545
  %v610 = vunpack.c.l.b16 %v546
  %v611 = vunpack.c.l.b16 %v547
  %v612 = vunpack.c.l.b16 %v548
  %v613 = vunpack.c.l.b16 %v549
  %v614 = vunpack.c.l.b16 %v550
  %v615 = vunpack.c.l.b16 %v551
  %v616 = vunpack.c.l.b16 %v552
  %v617 = vunpack.c.l.b16 %v553
  %v618 = vunpack.c.l.b16 %v554
  %v619 = vunpack.c.l.b16 %v555
  %v620 = vunpack.c.l.b16 %v556
  %v621 = vunpack.c.l.b16 %v557
  %v622 = vunpack.c.l.b16 %v558
  %v623 = vunpack.c.l.b16 %v559
  %v624 = vunpack.c.l.b16 %v560
  %v625 = vunpack.c.l.b16 %v561
  %v626 = vunpack.c.l.b16 %v562
  %v627 = vunpack.c.l.b16 %v563
  %v628 = vunpack.c.l.b16 %v564
  %v629 = vunpack.c.l.b16 %v565
  %v630 = vpack.c.b16 %v599, %v598
  %v631 = vpack.c.b16 %v601, %v600
  %v632 = vpack.c.b16 %v603, %v602
  %v633 = vpack.c.b16 %v605, %v604
  %v634 = vpack.c.b16 %v607, %v606
  %v635 = vpack.c.b16 %v609, %v608
  %v636 = vpack.c.b16 %v611, %v610
  %v637 = vpack.c.b16 %v613, %v612
  %v638 = vpack.c.b16 %v615, %v614
  %v639 = vpack.c.b16 %v617, %v616
  %v640 = vpack.c.b16 %v619, %v618
  %v641 = vpack.c.b16 %v621, %v620
  %v642 = vpack.c.b16 %v623, %v622
  %v643 = vpack.c.b16 %v625, %v624
  %v644 = vpack.c.b16 %v627, %v626
  %v645 = vpack.c.b16 %v629, %v628
  %662 = vmatprep.subr.bf16.mxu0 0
  %663 = vmatpush1.bf16.msra.mxu0 %v630
  %664 = vmatprep.subr.bf16.mxu0 0
  %665 = vmatpush1.bf16.msra.mxu0 %v631
  %666 = vmatprep.subr.bf16.mxu0 0
  %667 = vmatpush1.bf16.msra.mxu0 %v632
  %668 = vmatprep.subr.bf16.mxu0 0
  %669 = vmatpush1.bf16.msra.mxu0 %v633
  %670 = vmatprep.subr.bf16.mxu0 0
  %671 = vmatpush1.bf16.msra.mxu0 %v634
  %672 = vmatprep.subr.bf16.mxu0 0
  %673 = vmatpush1.bf16.msra.mxu0 %v635
  %674 = vmatprep.subr.bf16.mxu0 0
  %675 = vmatpush1.bf16.msra.mxu0 %v636
  %676 = vmatprep.subr.bf16.mxu0 0
  %677 = vmatpush1.bf16.msra.mxu0 %v637
  %678 = vmatprep.subr.bf16.mxu0 0
  %679 = vmatpush1.bf16.msra.mxu0 %v638
  %680 = vmatprep.subr.bf16.mxu0 0
  %681 = vmatpush1.bf16.msra.mxu0 %v639
  %682 = vmatprep.subr.bf16.mxu0 0
  %683 = vmatpush1.bf16.msra.mxu0 %v640
  %684 = vmatprep.subr.bf16.mxu0 0
  %685 = vmatpush1.bf16.msra.mxu0 %v641
  %686 = vmatprep.subr.bf16.mxu0 0
  %687 = vmatpush1.bf16.msra.mxu0 %v642
  %688 = vmatprep.subr.bf16.mxu0 0
  %689 = vmatpush1.bf16.msra.mxu0 %v643
  %690 = vmatprep.subr.bf16.mxu0 0
  %691 = vmatpush1.bf16.msra.mxu0 %v644
  %692 = vmatprep.subr.bf16.mxu0 0
  %693 = vmatpush1.bf16.msra.mxu0 %v645
  %694 = vmatprep.mubr.bf16.mxu0 %v531
  %695 = vmatmul.mubr.bf16.gmra.mrb[0].mxu0 %v530
  %v696 = vpop.f32.mrb[0].mxu0
  %v697 = vadd.f32 0.0, %v696
  %v698 = vpop.f32.mrb[0].mxu0
  %v699 = vpop.f32.mrb[0].mxu0
  %v700 = vadd.f32 0.0, %v699
  %v701 = vpop.f32.mrb[0].mxu0
  %702 = vmatprep.mubr.bf16.mxu0 %v533
  %703 = vmatmul.mubr.bf16.gmra.mrb[0].mxu0 %v532
  %v704 = vpop.f32.mrb[0].mxu0
  %v705 = vadd.f32 0.0, %v704
  %v706 = vpop.f32.mrb[0].mxu0
  %v707 = vpop.f32.mrb[0].mxu0
  %v708 = vadd.f32 0.0, %v707
  %v709 = vpop.f32.mrb[0].mxu0
  %710 = vdwg.mxu0
  %v711 = vadd.s32 %v239, 32
  %v712 = vadd.s32 %v239, 40
  %v713 = vadd.s32 %v239, 48
  %v714 = vadd.s32 %v239, 56
  %v715 = vadd.s32 %v239, 64
  %v716 = vadd.s32 %v239, 72
  %v717 = vadd.s32 %v239, 80
  %v718 = vadd.s32 %v239, 88
  %v719 = vadd.s32 %v239, 96
  %v720 = vadd.s32 %v239, 104
  %v721 = vadd.s32 %v239, 112
  %v722 = vadd.s32 %v239, 120
  %v723 = vadd.s32 %v239, 128
  %v724 = vadd.s32 %v239, 136
  %v725 = vadd.s32 %v239, 144
  %v726 = vadd.s32 %v239, 152
  %v727 = vadd.s32 %v239, 160
  %v728 = vadd.s32 %v239, 168
  %v729 = vadd.s32 %v239, 176
  %v730 = vadd.s32 %v239, 184
  %v731 = vadd.s32 %v239, 192
  %v732 = vadd.s32 %v239, 200
  %v733 = vadd.s32 %v239, 208
  %v734 = vadd.s32 %v239, 216
  %v735 = vadd.s32 %v239, 224
  %v736 = vadd.s32 %v239, 232
  %v737 = vadd.s32 %v239, 240
  %v738 = vadd.s32 %v239, 248
  %v739 = vshra.s32 %v239, 5
  %v740 = vshra.s32 %v240, 5
  %v741 = vshra.s32 %v241, 5
  %v742 = vshra.s32 %v242, 5
  %v743 = vshra.s32 %v711, 5
  %v744 = vshra.s32 %v712, 5
  %v745 = vshra.s32 %v713, 5
  %v746 = vshra.s32 %v714, 5
  %v747 = vshra.s32 %v715, 5
  %v748 = vshra.s32 %v716, 5
  %v749 = vshra.s32 %v717, 5
  %v750 = vshra.s32 %v718, 5
  %v751 = vshra.s32 %v719, 5
  %v752 = vshra.s32 %v720, 5
  %v753 = vshra.s32 %v721, 5
  %v754 = vshra.s32 %v722, 5
  %v755 = vshra.s32 %v723, 5
  %v756 = vshra.s32 %v724, 5
  %v757 = vshra.s32 %v725, 5
  %v758 = vshra.s32 %v726, 5
  %v759 = vshra.s32 %v727, 5
  %v760 = vshra.s32 %v728, 5
  %v761 = vshra.s32 %v729, 5
  %v762 = vshra.s32 %v730, 5
  %v763 = vshra.s32 %v731, 5
  %v764 = vshra.s32 %v732, 5
  %v765 = vshra.s32 %v733, 5
  %v766 = vshra.s32 %v734, 5
  %v767 = vshra.s32 %v735, 5
  %v768 = vshra.s32 %v736, 5
  %v769 = vshra.s32 %v737, 5
  %v770 = vshra.s32 %v738, 5
  %v771 = vshra.s32 %v244, 3
  %vm772 = vcmp.eq.s32.totalorder %v739, %v771
  %vm773 = vcmp.eq.s32.totalorder %v740, %v771
  %vm774 = vcmp.eq.s32.totalorder %v741, %v771
  %vm775 = vcmp.eq.s32.totalorder %v742, %v771
  %vm776 = vcmp.eq.s32.totalorder %v743, %v771
  %vm777 = vcmp.eq.s32.totalorder %v744, %v771
  %vm778 = vcmp.eq.s32.totalorder %v745, %v771
  %vm779 = vcmp.eq.s32.totalorder %v746, %v771
  %vm780 = vcmp.eq.s32.totalorder %v747, %v771
  %vm781 = vcmp.eq.s32.totalorder %v748, %v771
  %vm782 = vcmp.eq.s32.totalorder %v749, %v771
  %vm783 = vcmp.eq.s32.totalorder %v750, %v771
  %vm784 = vcmp.eq.s32.totalorder %v751, %v771
  %vm785 = vcmp.eq.s32.totalorder %v752, %v771
  %vm786 = vcmp.eq.s32.totalorder %v753, %v771
  %vm787 = vcmp.eq.s32.totalorder %v754, %v771
  %vm788 = vcmp.eq.s32.totalorder %v755, %v771
  %vm789 = vcmp.eq.s32.totalorder %v756, %v771
  %vm790 = vcmp.eq.s32.totalorder %v757, %v771
  %vm791 = vcmp.eq.s32.totalorder %v758, %v771
  %vm792 = vcmp.eq.s32.totalorder %v759, %v771
  %vm793 = vcmp.eq.s32.totalorder %v760, %v771
  %vm794 = vcmp.eq.s32.totalorder %v761, %v771
  %vm795 = vcmp.eq.s32.totalorder %v762, %v771
  %vm796 = vcmp.eq.s32.totalorder %v763, %v771
  %vm797 = vcmp.eq.s32.totalorder %v764, %v771
  %vm798 = vcmp.eq.s32.totalorder %v765, %v771
  %vm799 = vcmp.eq.s32.totalorder %v766, %v771
  %vm800 = vcmp.eq.s32.totalorder %v767, %v771
  %vm801 = vcmp.eq.s32.totalorder %v768, %v771
  %vm802 = vcmp.eq.s32.totalorder %v769, %v771
  %vm803 = vcmp.eq.s32.totalorder %v770, %v771
  %vm804 = vmpackc.low %vm773, %vm772
  %vm805 = vmpackc.low %vm775, %vm774
  %vm806 = vmpackc.low %vm777, %vm776
  %vm807 = vmpackc.low %vm779, %vm778
  %vm808 = vmpackc.low %vm781, %vm780
  %vm809 = vmpackc.low %vm783, %vm782
  %vm810 = vmpackc.low %vm785, %vm784
  %vm811 = vmpackc.low %vm787, %vm786
  %vm812 = vmpackc.low %vm789, %vm788
  %vm813 = vmpackc.low %vm791, %vm790
  %vm814 = vmpackc.low %vm793, %vm792
  %vm815 = vmpackc.low %vm795, %vm794
  %vm816 = vmpackc.low %vm797, %vm796
  %vm817 = vmpackc.low %vm799, %vm798
  %vm818 = vmpackc.low %vm801, %vm800
  %vm819 = vmpackc.low %vm803, %vm802
  %v820 = vsel %vm804, %v120, 0
  %v821 = vsel %vm805, %v121, 0
  %v822 = vsel %vm806, %v120, 0
  %v823 = vsel %vm807, %v121, 0
  %v824 = vsel %vm808, %v120, 0
  %v825 = vsel %vm809, %v121, 0
  %v826 = vsel %vm810, %v120, 0
  %v827 = vsel %vm811, %v121, 0
  %v828 = vsel %vm812, %v120, 0
  %v829 = vsel %vm813, %v121, 0
  %v830 = vsel %vm814, %v120, 0
  %v831 = vsel %vm815, %v121, 0
  %v832 = vsel %vm816, %v120, 0
  %v833 = vsel %vm817, %v121, 0
  %v834 = vsel %vm818, %v120, 0
  %v835 = vsel %vm819, %v121, 0
  %836 = vmatprep.subr.bf16.mxu0 0
  %837 = vmatpush1.bf16.msra.mxu0 %v820
  %838 = vmatprep.subr.bf16.mxu0 0
  %839 = vmatpush1.bf16.msra.mxu0 %v821
  %840 = vmatprep.subr.bf16.mxu0 0
  %841 = vmatpush1.bf16.msra.mxu0 %v822
  %842 = vmatprep.subr.bf16.mxu0 0
  %843 = vmatpush1.bf16.msra.mxu0 %v823
  %844 = vmatprep.subr.bf16.mxu0 0
  %845 = vmatpush1.bf16.msra.mxu0 %v824
  %846 = vmatprep.subr.bf16.mxu0 0
  %847 = vmatpush1.bf16.msra.mxu0 %v825
  %848 = vmatprep.subr.bf16.mxu0 0
  %849 = vmatpush1.bf16.msra.mxu0 %v826
  %850 = vmatprep.subr.bf16.mxu0 0
  %851 = vmatpush1.bf16.msra.mxu0 %v827
  %852 = vmatprep.subr.bf16.mxu0 0
  %853 = vmatpush1.bf16.msra.mxu0 %v828
  %854 = vmatprep.subr.bf16.mxu0 0
  %855 = vmatpush1.bf16.msra.mxu0 %v829
  %856 = vmatprep.subr.bf16.mxu0 0
  %857 = vmatpush1.bf16.msra.mxu0 %v830
  %858 = vmatprep.subr.bf16.mxu0 0
  %859 = vmatpush1.bf16.msra.mxu0 %v831
  %860 = vmatprep.subr.bf16.mxu0 0
  %861 = vmatpush1.bf16.msra.mxu0 %v832
  %862 = vmatprep.subr.bf16.mxu0 0
  %863 = vmatpush1.bf16.msra.mxu0 %v833
  %864 = vmatprep.subr.bf16.mxu0 0
  %865 = vmatpush1.bf16.msra.mxu0 %v834
  %866 = vmatprep.subr.bf16.mxu0 0
  %867 = vmatpush1.bf16.msra.mxu0 %v835
  %868 = vmatprep.mubr.bf16.mxu0 %v531
  %869 = vmatmul.mubr.bf16.gmra.mrb[0].mxu0 %v530
  %v870 = vpop.f32.mrb[0].mxu0
  %v871 = vadd.f32 0.0, %v870
  %v872 = vpop.f32.mrb[0].mxu0
  %v873 = vpop.f32.mrb[0].mxu0
  %v874 = vadd.f32 0.0, %v873
  %v875 = vpop.f32.mrb[0].mxu0
  %876 = vmatprep.mubr.bf16.mxu0 %v533
  %877 = vmatmul.mubr.bf16.gmra.mrb[0].mxu0 %v532
  %v878 = vpop.f32.mrb[0].mxu0
  %v879 = vadd.f32 0.0, %v878
  %v880 = vpop.f32.mrb[0].mxu0
  %v881 = vpop.f32.mrb[0].mxu0
  %v882 = vadd.f32 0.0, %v881
  %v883 = vpop.f32.mrb[0].mxu0
  %884 = vdwg.mxu0
  %v885 = vld [vmem:[%s5] sm:$0xff]
  %vm886 = vcmask 64512
  %v888 = vsel %vm886, %v697, 0
  %v891 = vsel %vm886, %v700, 0
  %v894 = vsel %vm886, %v705, 0
  %v897 = vsel %vm886, %v708, 0
  %899 = vmatprep.subr.mxu0 0.0
  %900 = vmatpush1.msra.mxu0 %v885
  %901 = vmatprep.subr.mxu0 0.0
  %902 = vmatpush1.msra.mxu0 0.0
  %903 = vmatprep.subr.mxu0 0.0
  %904 = vmatpush1.msra.mxu0 0.0
  %905 = vmatprep.subr.mxu0 0.0
  %906 = vmatpush1.msra.mxu0 0.0
  %907 = vmatprep.subr.mxu0 0.0
  %908 = vmatpush1.msra.mxu0 0.0
  %909 = vmatprep.subr.mxu0 0.0
  %910 = vmatpush1.msra.mxu0 0.0
  %911 = vmatprep.subr.mxu0 0.0
  %912 = vmatpush1.msra.mxu0 0.0
  %913 = vmatprep.subr.mxu0 0.0
  %914 = vmatpush1.msra.mxu0 0.0
  %915 = vmatprep.subr.mxu0 0.0
  %916 = vmatpush1.msra.mxu0 0.0
  %917 = vmatprep.subr.mxu0 0.0
  %918 = vmatpush1.msra.mxu0 0.0
  %919 = vmatprep.subr.mxu0 0.0
  %920 = vmatpush1.msra.mxu0 0.0
  %921 = vmatprep.subr.mxu0 0.0
  %922 = vmatpush1.msra.mxu0 0.0
  %923 = vmatprep.subr.mxu0 0.0
  %924 = vmatpush1.msra.mxu0 0.0
  %925 = vmatprep.subr.mxu0 0.0
  %926 = vmatpush1.msra.mxu0 0.0
  %927 = vmatprep.subr.mxu0 0.0
  %928 = vmatpush1.msra.mxu0 0.0
  %929 = vmatprep.subr.mxu0 0.0
  %930 = vmatpush1.msra.mxu0 0.0
  %931 = vmatprep.subr.mxu0 0.0
  %932 = vmatpush1.msra.mxu0 0.0
  %933 = vmatprep.subr.mxu0 0.0
  %934 = vmatpush1.msra.mxu0 0.0
  %935 = vmatprep.subr.mxu0 0.0
  %936 = vmatpush1.msra.mxu0 0.0
  %937 = vmatprep.subr.mxu0 0.0
  %938 = vmatpush1.msra.mxu0 0.0
  %939 = vmatprep.subr.mxu0 0.0
  %940 = vmatpush1.msra.mxu0 0.0
  %941 = vmatprep.subr.mxu0 0.0
  %942 = vmatpush1.msra.mxu0 0.0
  %943 = vmatprep.subr.mxu0 0.0
  %944 = vmatpush1.msra.mxu0 0.0
  %945 = vmatprep.subr.mxu0 0.0
  %946 = vmatpush1.msra.mxu0 0.0
  %947 = vmatprep.subr.mxu0 0.0
  %948 = vmatpush1.msra.mxu0 0.0
  %949 = vmatprep.subr.mxu0 0.0
  %950 = vmatpush1.msra.mxu0 0.0
  %951 = vmatprep.subr.mxu0 0.0
  %952 = vmatpush1.msra.mxu0 0.0
  %953 = vmatprep.subr.mxu0 0.0
  %954 = vmatpush1.msra.mxu0 0.0
  %955 = vmatprep.subr.mxu0 0.0
  %956 = vmatpush1.msra.mxu0 0.0
  %957 = vmatprep.subr.mxu0 0.0
  %958 = vmatpush1.msra.mxu0 0.0
  %959 = vmatprep.subr.mxu0 0.0
  %960 = vmatpush1.msra.mxu0 0.0
  %961 = vmatprep.subr.mxu0 0.0
  %962 = vmatpush1.msra.mxu0 0.0
  %963 = vmatprep.mubr.f32.mxu0 0.0
  %964 = vmatmul.mubr.f32.gmra.mrb[0].mxu0 %v888
  %v965 = vpop.f32.mrb[0].mxu0
  %v966 = vadd.f32 0.0, %v965
  %v967 = vpop.f32.mrb[0].mxu0
  %968 = vmatprep.mubr.f32.mxu0 0.0
  %969 = vmatmul.mubr.f32.gmra.mrb[0].mxu0 %v891
  %v970 = vpop.f32.mrb[0].mxu0
  %v971 = vadd.f32 0.0, %v970
  %v972 = vpop.f32.mrb[0].mxu0
  %973 = vmatprep.mubr.f32.mxu0 0.0
  %974 = vmatmul.mubr.f32.gmra.mrb[0].mxu0 %v894
  %v975 = vpop.f32.mrb[0].mxu0
  %v976 = vadd.f32 0.0, %v975
  %v977 = vpop.f32.mrb[0].mxu0
  %978 = vmatprep.mubr.f32.mxu0 0.0
  %979 = vmatmul.mubr.f32.gmra.mrb[0].mxu0 %v897
  %v980 = vpop.f32.mrb[0].mxu0
  %v981 = vadd.f32 0.0, %v980
  %v982 = vpop.f32.mrb[0].mxu0
  %983 = vdwg.mxu0
  %v984 = vrcp.pop %v966
  %v985 = vrcp.pop %v971
  %v986 = vrcp.pop %v976
  %v987 = vrcp.pop %v981
  %v988 = vmul.f32 %v871, %v984
  %v989 = vmul.f32 %v874, %v985
  %v990 = vmul.f32 %v879, %v986
  %v991 = vmul.f32 %v882, %v987
  %v992 = vld [vmem:[%s6] sm:$0x1]
  %v994 = vlaneseq
  %v995 = vshrl.u32 %v994, 7
  %v996 = vsub.s32 0, %v995
  %v997 = vrot.slane %v992, %v996
  %v999 = vadd.f32 %v988, %v997
  %v1000 = vadd.f32 %v989, %v997
  %v1001 = vadd.f32 %v990, %v997
  %v1002 = vadd.f32 %v991, %v997
  %vm1003 = vcmp.gt.f32.partialorder %v999, 0.0
  %vm1004 = vcmp.gt.f32.partialorder %v1000, 0.0
  %vm1005 = vcmp.gt.f32.partialorder %v1001, 0.0
  %vm1006 = vcmp.gt.f32.partialorder %v1002, 0.0
  %v1007 = vmul.f32 %v999, 1.442695
  %v1008 = vpow.pop %v1007
  %v1009 = vmul.f32 %v1000, 1.442695
  %v1010 = vpow.pop %v1009
  %v1011 = vmul.f32 %v1001, 1.442695
  %v1012 = vpow.pop %v1011
  %v1013 = vmul.f32 %v1002, 1.442695
  %v1014 = vpow.pop %v1013
  %v1015 = vsub.f32 %v1008, 1.0
  %v1016 = vsub.f32 %v1010, 1.0
  %v1017 = vsub.f32 %v1012, 1.0
  %v1018 = vsub.f32 %v1014, 1.0
  %v1019 = vsel %vm1003, %v999, %v1015
  %v1020 = vsel %vm1004, %v1000, %v1016
  %v1021 = vsel %vm1005, %v1001, %v1017
  %v1022 = vsel %vm1006, %v1002, %v1018
  %v1023 = vpack.c.bf16 %v1020, %v1019
  %v1024 = vpack.c.bf16 %v1022, %v1021
  %v1025 = vld [vmem:[%s7] sm:$0xf]
  %v1026 = vld [vmem:[%s7 + $0x4] sm:$0xf]
  %v1027 = vld [vmem:[%s7 + $0x8] sm:$0xf]
  %v1028 = vld [vmem:[%s7 + $0xc] sm:$0xf]
  %v1029 = vld [vmem:[%s7 + $0x10] sm:$0xf]
  %v1030 = vld [vmem:[%s7 + $0x14] sm:$0xf]
  %v1031 = vld [vmem:[%s7 + $0x18] sm:$0xf]
  %v1032 = vld [vmem:[%s7 + $0x1c] sm:$0xf]
  %v1041 = vunpack.c.l.b16 %v1025
  %v1042 = vunpack.c.l.b16 %v1026
  %v1043 = vunpack.c.l.b16 %v1027
  %v1044 = vunpack.c.l.b16 %v1028
  %v1045 = vunpack.c.l.b16 %v1029
  %v1046 = vunpack.c.l.b16 %v1030
  %v1047 = vunpack.c.l.b16 %v1031
  %v1048 = vunpack.c.l.b16 %v1032
  %v1049 = vpack.c.b16 %v1042, %v1041
  %v1050 = vpack.c.b16 %v1044, %v1043
  %v1051 = vpack.c.b16 %v1046, %v1045
  %v1052 = vpack.c.b16 %v1048, %v1047
  %v1058 = vsel %vm178, %v1023, 0
  %v1061 = vsel %vm178, %v1024, 0
  %1063 = vmatprep.subr.bf16.mxu0 0
  %1064 = vmatpush1.bf16.msra.mxu0 %v1049
  %1065 = vmatprep.subr.bf16.mxu0 0
  %1066 = vmatpush1.bf16.msra.mxu0 %v1050
  %1067 = vmatprep.subr.bf16.mxu0 0
  %1068 = vmatpush1.bf16.msra.mxu0 %v1051
  %1069 = vmatprep.subr.bf16.mxu0 0
  %1070 = vmatpush1.bf16.msra.mxu0 %v1052
  %1071 = vmatprep.subr.bf16.mxu0 0
  %1072 = vmatpush1.bf16.msra.mxu0 0
  %1073 = vmatprep.subr.bf16.mxu0 0
  %1074 = vmatpush1.bf16.msra.mxu0 0
  %1075 = vmatprep.subr.bf16.mxu0 0
  %1076 = vmatpush1.bf16.msra.mxu0 0
  %1077 = vmatprep.subr.bf16.mxu0 0
  %1078 = vmatpush1.bf16.msra.mxu0 0
  %1079 = vmatprep.subr.bf16.mxu0 0
  %1080 = vmatpush1.bf16.msra.mxu0 0
  %1081 = vmatprep.subr.bf16.mxu0 0
  %1082 = vmatpush1.bf16.msra.mxu0 0
  %1083 = vmatprep.subr.bf16.mxu0 0
  %1084 = vmatpush1.bf16.msra.mxu0 0
  %1085 = vmatprep.subr.bf16.mxu0 0
  %1086 = vmatpush1.bf16.msra.mxu0 0
  %1087 = vmatprep.subr.bf16.mxu0 0
  %1088 = vmatpush1.bf16.msra.mxu0 0
  %1089 = vmatprep.subr.bf16.mxu0 0
  %1090 = vmatpush1.bf16.msra.mxu0 0
  %1091 = vmatprep.subr.bf16.mxu0 0
  %1092 = vmatpush1.bf16.msra.mxu0 0
  %1093 = vmatprep.subr.bf16.mxu0 0
  %1094 = vmatpush1.bf16.msra.mxu0 0
  %1095 = vmatprep.mubr.bf16.mxu0 0
  %1096 = vmatmul.mubr.bf16.gmra.mrb[0].mxu0 %v1058
  %v1097 = vpop.f32.mrb[0].mxu0
  %v1098 = vadd.f32 0.0, %v1097
  %v1099 = vpop.f32.mrb[0].mxu0
  %v1100 = vpop.f32.mrb[0].mxu0
  %v1101 = vadd.f32 0.0, %v1100
  %v1102 = vpop.f32.mrb[0].mxu0
  %1103 = vmatprep.mubr.bf16.mxu0 0
  %1104 = vmatmul.mubr.bf16.gmra.mrb[0].mxu0 %v1061
  %v1105 = vpop.f32.mrb[0].mxu0
  %v1106 = vadd.f32 0.0, %v1105
  %v1107 = vpop.f32.mrb[0].mxu0
  %v1108 = vpop.f32.mrb[0].mxu0
  %v1109 = vadd.f32 0.0, %v1108
  %v1110 = vpop.f32.mrb[0].mxu0
  %1111 = vdwg.mxu0
  %v1112 = vpack.c.bf16 %v1101, %v1098
  %v1113 = vpack.c.bf16 %v1109, %v1106
  %v1114 = vld [vmem:[%s8] sm:$0xf]
  %v1115 = vld [vmem:[%s8 + $0x4] sm:$0xf]
  %v1116 = vld [vmem:[%s8 + $0x8] sm:$0xf]
  %v1117 = vld [vmem:[%s8 + $0xc] sm:$0xf]
  %v1118 = vld [vmem:[%s8 + $0x10] sm:$0xf]
  %v1119 = vld [vmem:[%s8 + $0x14] sm:$0xf]
  %v1120 = vld [vmem:[%s8 + $0x18] sm:$0xf]
  %v1121 = vld [vmem:[%s8 + $0x1c] sm:$0xf]
  %v1122 = vld [vmem:[%s8 + $0x20] sm:$0xf]
  %v1123 = vld [vmem:[%s8 + $0x24] sm:$0xf]
  %v1124 = vld [vmem:[%s8 + $0x28] sm:$0xf]
  %v1125 = vld [vmem:[%s8 + $0x2c] sm:$0xf]
  %v1126 = vld [vmem:[%s8 + $0x30] sm:$0xf]
  %v1127 = vld [vmem:[%s8 + $0x34] sm:$0xf]
  %v1128 = vld [vmem:[%s8 + $0x38] sm:$0xf]
  %v1129 = vld [vmem:[%s8 + $0x3c] sm:$0xf]
  %v1146 = vunpack.c.l.b16 %v1114
  %v1147 = vunpack.c.l.b16 %v1115
  %v1148 = vunpack.c.l.b16 %v1116
  %v1149 = vunpack.c.l.b16 %v1117
  %v1150 = vunpack.c.l.b16 %v1118
  %v1151 = vunpack.c.l.b16 %v1119
  %v1152 = vunpack.c.l.b16 %v1120
  %v1153 = vunpack.c.l.b16 %v1121
  %v1154 = vunpack.c.l.b16 %v1122
  %v1155 = vunpack.c.l.b16 %v1123
  %v1156 = vunpack.c.l.b16 %v1124
  %v1157 = vunpack.c.l.b16 %v1125
  %v1158 = vunpack.c.l.b16 %v1126
  %v1159 = vunpack.c.l.b16 %v1127
  %v1160 = vunpack.c.l.b16 %v1128
  %v1161 = vunpack.c.l.b16 %v1129
  %v1162 = vpack.c.b16 %v1147, %v1146
  %v1163 = vpack.c.b16 %v1149, %v1148
  %v1164 = vpack.c.b16 %v1151, %v1150
  %v1165 = vpack.c.b16 %v1153, %v1152
  %v1166 = vpack.c.b16 %v1155, %v1154
  %v1167 = vpack.c.b16 %v1157, %v1156
  %v1168 = vpack.c.b16 %v1159, %v1158
  %v1169 = vpack.c.b16 %v1161, %v1160
  %1178 = vmatprep.subr.bf16.mxu0 0
  %1179 = vmatpush1.bf16.msra.mxu0 %v1162
  %1180 = vmatprep.subr.bf16.mxu0 0
  %1181 = vmatpush1.bf16.msra.mxu0 %v1163
  %1182 = vmatprep.subr.bf16.mxu0 0
  %1183 = vmatpush1.bf16.msra.mxu0 %v1164
  %1184 = vmatprep.subr.bf16.mxu0 0
  %1185 = vmatpush1.bf16.msra.mxu0 %v1165
  %1186 = vmatprep.subr.bf16.mxu0 0
  %1187 = vmatpush1.bf16.msra.mxu0 %v1166
  %1188 = vmatprep.subr.bf16.mxu0 0
  %1189 = vmatpush1.bf16.msra.mxu0 %v1167
  %1190 = vmatprep.subr.bf16.mxu0 0
  %1191 = vmatpush1.bf16.msra.mxu0 %v1168
  %1192 = vmatprep.subr.bf16.mxu0 0
  %1193 = vmatpush1.bf16.msra.mxu0 %v1169
  %1194 = vmatprep.subr.bf16.mxu0 0
  %1195 = vmatpush1.bf16.msra.mxu0 0
  %1196 = vmatprep.subr.bf16.mxu0 0
  %1197 = vmatpush1.bf16.msra.mxu0 0
  %1198 = vmatprep.subr.bf16.mxu0 0
  %1199 = vmatpush1.bf16.msra.mxu0 0
  %1200 = vmatprep.subr.bf16.mxu0 0
  %1201 = vmatpush1.bf16.msra.mxu0 0
  %1202 = vmatprep.subr.bf16.mxu0 0
  %1203 = vmatpush1.bf16.msra.mxu0 0
  %1204 = vmatprep.subr.bf16.mxu0 0
  %1205 = vmatpush1.bf16.msra.mxu0 0
  %1206 = vmatprep.subr.bf16.mxu0 0
  %1207 = vmatpush1.bf16.msra.mxu0 0
  %1208 = vmatprep.subr.bf16.mxu0 0
  %1209 = vmatpush1.bf16.msra.mxu0 0
  %1210 = vmatprep.mubr.bf16.mxu0 0
  %1211 = vmatmul.mubr.bf16.gmra.mrb[0].mxu0 %v1112
  %v1212 = vpop.f32.mrb[0].mxu0
  %v1213 = vadd.f32 0.0, %v1212
  %v1214 = vpop.f32.mrb[0].mxu0
  %v1215 = vpop.f32.mrb[0].mxu0
  %v1216 = vadd.f32 0.0, %v1215
  %v1217 = vpop.f32.mrb[0].mxu0
  %1218 = vmatprep.mubr.bf16.mxu0 0
  %1219 = vmatmul.mubr.bf16.gmra.mrb[0].mxu0 %v1113
  %v1220 = vpop.f32.mrb[0].mxu0
  %v1221 = vadd.f32 0.0, %v1220
  %v1222 = vpop.f32.mrb[0].mxu0
  %v1223 = vpop.f32.mrb[0].mxu0
  %v1224 = vadd.f32 0.0, %v1223
  %v1225 = vpop.f32.mrb[0].mxu0
  %1226 = vdwg.mxu0
  %1227 = vxpose.xlu0.b32.start [1/16] %v1213, 128
  %1228 = vxpose.xlu0.b32.cont [2/16] %v1216, 128
  %1229 = vxpose.xlu0.b32.cont [3/16] %v1221, 128
  %1230 = vxpose.xlu0.b32.cont [4/16] %v1224, 128
  %1231 = vxpose.xlu0.b32.cont [5/16] 0.0, 128
  %1232 = vxpose.xlu0.b32.cont [6/16] 0.0, 128
  %1233 = vxpose.xlu0.b32.cont [7/16] 0.0, 128
  %1234 = vxpose.xlu0.b32.cont [8/16] 0.0, 128
  %1235 = vxpose.xlu0.b32.cont [9/16] 0.0, 128
  %1236 = vxpose.xlu0.b32.cont [10/16] 0.0, 128
  %1237 = vxpose.xlu0.b32.cont [11/16] 0.0, 128
  %1238 = vxpose.xlu0.b32.cont [12/16] 0.0, 128
  %1239 = vxpose.xlu0.b32.cont [13/16] 0.0, 128
  %1240 = vxpose.xlu0.b32.cont [14/16] 0.0, 128
  %1241 = vxpose.xlu0.b32.cont [15/16] 0.0, 128
  %1242 = vxpose.xlu0.b32.end [16/16] 0.0, 128
  %v1243 = vpop.trf.xlu0
  %v1244 = vpop.trf.xlu0
  %v1245 = vpop.trf.xlu0
  %v1246 = vpop.trf.xlu0
  %v1247 = vpop.trf.xlu0
  %v1248 = vpop.trf.xlu0
  %v1249 = vpop.trf.xlu0
  %v1250 = vpop.trf.xlu0
  %v1251 = vpop.trf.xlu0
  %v1252 = vpop.trf.xlu0
  %v1253 = vpop.trf.xlu0
  %v1254 = vpop.trf.xlu0
  %v1255 = vpop.trf.xlu0
  %v1256 = vpop.trf.xlu0
  %v1257 = vpop.trf.xlu0
  %v1258 = vpop.trf.xlu0
  %1260 = vset.pattern.permute.xlu0 1
  %1261 = vperm.xlu0 %1260, %v1213
  %v1262 = vpop.permute.xlu0 %1261
  %1265 = vset.pattern.permute.xlu0 1
  %1266 = vperm.xlu0 %1265, %v1216
  %v1267 = vpop.permute.xlu0 %1266
  %1270 = vset.pattern.permute.xlu0 1
  %1271 = vperm.xlu0 %1270, %v1221
  %v1272 = vpop.permute.xlu0 %1271
  %1275 = vset.pattern.permute.xlu0 1
  %1276 = vperm.xlu0 %1275, %v1224
  %v1277 = vpop.permute.xlu0 %1276
  %v1279 = vlaneseq
  %v1280 = vshrl.u32 %v1279, 7
  %v1281 = vsub.s32 0, %v1280
  %v1282 = vrot.slane %v1243, %v1281
  %v1283 = vadd.f32 %v1262, %v1282
  %v1284 = vadd.f32 %v1267, %v1282
  %v1285 = vadd.f32 %v1272, %v1282
  %v1286 = vadd.f32 %v1277, %v1282
  %vm1287 = vcmp.gt.f32.partialorder %v1283, 0.0
  %vm1288 = vcmp.gt.f32.partialorder %v1284, 0.0
  %vm1289 = vcmp.gt.f32.partialorder %v1285, 0.0
  %vm1290 = vcmp.gt.f32.partialorder %v1286, 0.0
  %v1291 = vmul.f32 %v1283, 0.2
  %v1292 = vmul.f32 %v1284, 0.2
  %v1293 = vmul.f32 %v1285, 0.2
  %v1294 = vmul.f32 %v1286, 0.2
  %v1295 = vsel %vm1287, %v1283, %v1291
  %v1296 = vsel %vm1288, %v1284, %v1292
  %v1297 = vsel %vm1289, %v1285, %v1293
  %v1298 = vsel %vm1290, %v1286, %v1294
  %v1299 = vld [vmem:[%s11] sm:$0xf]
  %v1300 = vld [vmem:[%s11 + $0x4] sm:$0xf]
  %v1301 = vld [vmem:[%s11 + $0x8] sm:$0xf]
  %v1302 = vld [vmem:[%s11 + $0xc] sm:$0xf]
  %v1303 = vunpack.c.l.bf16 %v1299
  %v1304 = vunpack.c.l.bf16 %v1300
  %v1305 = vunpack.c.l.bf16 %v1301
  %v1306 = vunpack.c.l.bf16 %v1302
  %v1307 = vadd.f32 %v1295, %v1303
  %v1308 = vadd.f32 %v1296, %v1304
  %v1309 = vadd.f32 %v1297, %v1305
  %v1310 = vadd.f32 %v1298, %v1306
  %v1311 = vsel %vm264, %v1307, -inf
  %1312 = vmax.xlane.f32.xlu0 %v1311
  %v1313 = vpop.xlane.xlu0 %1312
  %v1314 = vsel %vm264, %v1308, -inf
  %1315 = vmax.xlane.f32.xlu0 %v1314
  %v1316 = vpop.xlane.xlu0 %1315
  %v1317 = vsel %vm264, %v1309, -inf
  %1318 = vmax.xlane.f32.xlu0 %v1317
  %v1319 = vpop.xlane.xlu0 %1318
  %v1320 = vsel %vm264, %v1310, -inf
  %1321 = vmax.xlane.f32.xlu0 %v1320
  %v1322 = vpop.xlane.xlu0 %1321
  %v1323 = vsub.f32 %v1307, %v1313
  %v1324 = vsub.f32 %v1308, %v1316
  %v1325 = vsub.f32 %v1309, %v1319
  %v1326 = vsub.f32 %v1310, %v1322
  %v1327 = vmul.f32 %v1323, 1.442695
  %v1328 = vpow.pop %v1327
  %v1329 = vmul.f32 %v1324, 1.442695
  %v1330 = vpow.pop %v1329
  %v1331 = vmul.f32 %v1325, 1.442695
  %v1332 = vpow.pop %v1331
  %v1333 = vmul.f32 %v1326, 1.442695
  %v1334 = vpow.pop %v1333
  %v1335 = vsel %vm264, %v1328, 0.0
  %1336 = vadd.xlane.f32.xlu0 %v1335
  %v1337 = vpop.xlane.xlu0 %1336
  %v1338 = vsel %vm264, %v1330, 0.0
  %1339 = vadd.xlane.f32.xlu0 %v1338
  %v1340 = vpop.xlane.xlu0 %1339
  %v1341 = vsel %vm264, %v1332, 0.0
  %1342 = vadd.xlane.f32.xlu0 %v1341
  %v1343 = vpop.xlane.xlu0 %1342
  %v1344 = vsel %vm264, %v1334, 0.0
  %1345 = vadd.xlane.f32.xlu0 %v1344
  %v1346 = vpop.xlane.xlu0 %1345
  %v1347 = vrcp.pop %v1337
  %v1348 = vrcp.pop %v1340
  %v1349 = vrcp.pop %v1343
  %v1350 = vrcp.pop %v1346
  %v1351 = vmul.f32 %v1328, %v1347
  %v1352 = vmul.f32 %v1330, %v1348
  %v1353 = vmul.f32 %v1332, %v1349
  %v1354 = vmul.f32 %v1334, %v1350
  %v1355 = vpack.c.bf16 %v1352, %v1351
  %v1356 = vpack.c.bf16 %v1354, %v1353
  %v1357 = vld [vmem:[%s9] sm:$0x1]
  %v1359 = vlaneseq
  %v1360 = vshrl.u32 %v1359, 7
  %v1361 = vsub.s32 0, %v1360
  %v1362 = vrot.slane %v1357, %v1361
  %v1365 = vsel %vm264, %v1355, 0
  %v1368 = vsel %vm264, %v1356, 0
  %1370 = vmatprep.subr.bf16.mxu0 0
  %1371 = vmatpush1.bf16.msra.mxu0 %v1112
  %1372 = vmatprep.subr.bf16.mxu0 0
  %1373 = vmatpush1.bf16.msra.mxu0 %v1113
  %1374 = vmatprep.subr.bf16.mxu0 0
  %1375 = vmatpush1.bf16.msra.mxu0 0
  %1376 = vmatprep.subr.bf16.mxu0 0
  %1377 = vmatpush1.bf16.msra.mxu0 0
  %1378 = vmatprep.subr.bf16.mxu0 0
  %1379 = vmatpush1.bf16.msra.mxu0 0
  %1380 = vmatprep.subr.bf16.mxu0 0
  %1381 = vmatpush1.bf16.msra.mxu0 0
  %1382 = vmatprep.subr.bf16.mxu0 0
  %1383 = vmatpush1.bf16.msra.mxu0 0
  %1384 = vmatprep.subr.bf16.mxu0 0
  %1385 = vmatpush1.bf16.msra.mxu0 0
  %1386 = vmatprep.subr.bf16.mxu0 0
  %1387 = vmatpush1.bf16.msra.mxu0 0
  %1388 = vmatprep.subr.bf16.mxu0 0
  %1389 = vmatpush1.bf16.msra.mxu0 0
  %1390 = vmatprep.subr.bf16.mxu0 0
  %1391 = vmatpush1.bf16.msra.mxu0 0
  %1392 = vmatprep.subr.bf16.mxu0 0
  %1393 = vmatpush1.bf16.msra.mxu0 0
  %1394 = vmatprep.subr.bf16.mxu0 0
  %1395 = vmatpush1.bf16.msra.mxu0 0
  %1396 = vmatprep.subr.bf16.mxu0 0
  %1397 = vmatpush1.bf16.msra.mxu0 0
  %1398 = vmatprep.subr.bf16.mxu0 0
  %1399 = vmatpush1.bf16.msra.mxu0 0
  %1400 = vmatprep.subr.bf16.mxu0 0
  %1401 = vmatpush1.bf16.msra.mxu0 0
  %1402 = vmatprep.mubr.bf16.mxu0 0
  %1403 = vmatmul.mubr.bf16.gmra.mrb[0].mxu0 %v1365
  %v1404 = vpop.f32.mrb[0].mxu0
  %v1405 = vadd.f32 %v1362, %v1404
  %v1406 = vpop.f32.mrb[0].mxu0
  %v1407 = vpop.f32.mrb[0].mxu0
  %v1408 = vadd.f32 %v1362, %v1407
  %v1409 = vpop.f32.mrb[0].mxu0
  %1410 = vmatprep.mubr.bf16.mxu0 0
  %1411 = vmatmul.mubr.bf16.gmra.mrb[0].mxu0 %v1368
  %v1412 = vpop.f32.mrb[0].mxu0
  %v1413 = vadd.f32 %v1362, %v1412
  %v1414 = vpop.f32.mrb[0].mxu0
  %v1415 = vpop.f32.mrb[0].mxu0
  %v1416 = vadd.f32 %v1362, %v1415
  %v1417 = vpop.f32.mrb[0].mxu0
  %1418 = vdwg.mxu0
  %1419 = vmax.xlane.f32.xlu0 %v1405
  %v1420 = vpop.xlane.xlu0 %1419
  %1421 = vmax.xlane.f32.xlu0 %v1408
  %v1422 = vpop.xlane.xlu0 %1421
  %1423 = vmax.xlane.f32.xlu0 %v1413
  %v1424 = vpop.xlane.xlu0 %1423
  %1425 = vmax.xlane.f32.xlu0 %v1416
  %v1426 = vpop.xlane.xlu0 %1425
  %v1427 = vsub.f32 %v1405, %v1420
  %v1428 = vsub.f32 %v1408, %v1422
  %v1429 = vsub.f32 %v1413, %v1424
  %v1430 = vsub.f32 %v1416, %v1426
  %v1431 = vmul.f32 %v1427, 1.442695
  %v1432 = vpow.pop %v1431
  %v1433 = vmul.f32 %v1428, 1.442695
  %v1434 = vpow.pop %v1433
  %v1435 = vmul.f32 %v1429, 1.442695
  %v1436 = vpow.pop %v1435
  %v1437 = vmul.f32 %v1430, 1.442695
  %v1438 = vpow.pop %v1437
  %1439 = vadd.xlane.f32.xlu0 %v1432
  %v1440 = vpop.xlane.xlu0 %1439
  %1441 = vadd.xlane.f32.xlu0 %v1434
  %v1442 = vpop.xlane.xlu0 %1441
  %1443 = vadd.xlane.f32.xlu0 %v1436
  %v1444 = vpop.xlane.xlu0 %1443
  %1445 = vadd.xlane.f32.xlu0 %v1438
  %v1446 = vpop.xlane.xlu0 %1445
  %v1447 = vlog2.pop %v1440
  %v1448 = vmul.f32 %v1447, 0.6931472
  %v1449 = vlog2.pop %v1442
  %v1450 = vmul.f32 %v1449, 0.6931472
  %v1451 = vlog2.pop %v1444
  %v1452 = vmul.f32 %v1451, 0.6931472
  %v1453 = vlog2.pop %v1446
  %v1454 = vmul.f32 %v1453, 0.6931472
  %v1455 = vadd.f32 %v1420, %v1448
  %v1456 = vadd.f32 %v1422, %v1450
  %v1457 = vadd.f32 %v1424, %v1452
  %v1458 = vadd.f32 %v1426, %v1454
  %v1459 = vsub.f32 %v1405, %v1455
  %v1460 = vsub.f32 %v1408, %v1456
  %v1461 = vsub.f32 %v1413, %v1457
  %v1462 = vsub.f32 %v1416, %v1458
  %1463 = vst [vmem:[%s12] sm:$0xff] %v1459
  %1464 = vst [vmem:[%s12 + $0x8] sm:$0xff] %v1460
  %1465 = vst [vmem:[%s12 + $0x10] sm:$0xff] %v1461
  %1466 = vst [vmem:[%s12 + $0x18] sm:$0xff] %v1462
  // Predicated region
  $region50: #{gat_forward.1} parent=0 // pred_check
    _
  $region51: #{gat_forward.1} parent=0 // pred_check_branch
    %1468 = sbr.rel (0) target = $region53
  $region52: #{gat_forward.1} parent=0 // pred_region
    _
  $region53: #{gat_forward.1} parent=0 // pred_fallthru
    _
  // Predicated region
  $region54: #{gat_forward.1} parent=0 // pred_check
    _
  $region55: #{gat_forward.1} parent=0 // pred_check_branch
    %1470 = sbr.rel (0) target = $region57
  $region56: #{gat_forward.1} parent=0 // pred_region
    _
  $region57: #{gat_forward.1} parent=0 // pred_fallthru
    _

</llo_original>
